<compile_context>
chip_gen: v7x
topology: tpu7x:2x2x1
jax: 0.10.0
libtpu: 0.0.40
codegen_flags: <defaults>
</compile_context>

<pallas_src>
import functools
import math

import jax
import jax.numpy as jnp
from jax.experimental import pallas as pl
from jax.experimental.pallas import tpu as pltpu

_C1 = 0.01 ** 2          # (0.01 * data_range)^2, data_range = 1.0
_C2 = 0.03 ** 2
_MAX_UNROLLED_GROUPS = 16  # above this, use lax.fori_loop(unroll=4)


def _diffusion_stats_kernel(x_ref, temb_ref, w_ref, eye_ref, stats_ref, *,
                            channels, hw, groups_per_block, total_groups):
    """One grid step: loss statistics for `groups_per_block` (b, t) frames.

    x_ref    : (groups_per_block*C, HW)  frames, native layout, row = g*C + c
    temb_ref : (groups_per_block*C, 1)   per-(frame, channel) time-emb bias
    w_ref    : (C, C)                    channel-mixing 1x1x1 conv weight W
    eye_ref  : (C, C)                    identity (diag extraction / W - I)
    stats_ref: (1, 8, 128)               [0, 0, 0:3] = [sum_se, sum_ae, sum_ssim]
    """
    C = channels
    n = float(hw)
    inv_hw = 1.0 / n
    block_start = pl.program_id(0) * groups_per_block

    w = w_ref[...].astype(jnp.float32)          # hoisted once per block
    eye = eye_ref[...].astype(jnp.float32)
    wm = w - eye                                # W - I, for pred - x

    def group_stats(g):
        # g is a Python int (unrolled path) or a traced int32 (fori_loop path).
        r0 = g * C
        x = x_ref[pl.ds(r0, C), :].astype(jnp.float32)     # (C, HW), f32 math
        b = temb_ref[pl.ds(r0, C), :].astype(jnp.float32)  # (C, 1)

        # ---- MXU: second moments of x, contracted over HW (Gram matrix) ----
        gram = jax.lax.dot_general(x, x, (((1,), (1,)), ((), ())),
                                   preferred_element_type=jnp.float32)  # (C,C)
        s = jnp.sum(x, axis=-1, keepdims=True)                          # (C,1)

        # ---- tiny (C,C)/(C,1) algebra: moments of pred = W x + b ----
        ws = jnp.dot(w, s, preferred_element_type=jnp.float32)          # (C,1)
        a = jnp.dot(w, gram, preferred_element_type=jnp.float32)        # (C,C)
        rx = s
        rxx = jnp.sum(gram * eye, axis=-1, keepdims=True)               # diag(G)
        rp = ws + n * b
        rpx = jnp.sum(w * gram, axis=-1, keepdims=True) + b * s
        rpp = (jnp.sum(a * w, axis=-1, keepdims=True)
               + 2.0 * b * ws + n * (b * b))

        # ---- only remaining per-element (VPU) pass: |pred - x| for MAE ----
        d = jnp.dot(wm, x, preferred_element_type=jnp.float32) + b      # (C,HW)
        ae = jnp.sum(jnp.abs(d))

        se = jnp.sum(rpp + rxx - 2.0 * rpx)          # sum (pred - x)^2

        mu_p = rp * inv_hw
        mu_x = rx * inv_hw
        var_p = rpp * inv_hw - mu_p * mu_p
        var_x = rxx * inv_hw - mu_x * mu_x
        cov = rpx * inv_hw - mu_p * mu_x
        num = (2.0 * mu_p * mu_x + _C1) * (2.0 * cov + _C2)
        den = (mu_p * mu_p + mu_x * mu_x + _C1) * (var_p + var_x + _C2)
        ss = jnp.sum(num / den)                      # exact divide (tiny (C,1))

        # Mask groups beyond B*T (cdiv-grid tail block reads undefined data).
        valid = (block_start + g) < total_groups
        zero = jnp.float32(0.0)
        return (jnp.where(valid, se, zero),
                jnp.where(valid, ae, zero),
                jnp.where(valid, ss, zero))

    if groups_per_block <= _MAX_UNROLLED_GROUPS:
        # Small, byte-targeted blocks at realistic shapes -> static slices.
        se_acc = jnp.float32(0.0)
        ae_acc = jnp.float32(0.0)
        ss_acc = jnp.float32(0.0)
        for g in range(groups_per_block):
            se, ae, ss = group_stats(g)
            se_acc = se_acc + se
            ae_acc = ae_acc + ae
            ss_acc = ss_acc + ss
    else:
        # Many tiny groups per block: bounded unroll keeps code size / vreg
        # live ranges under control.
        def body(g, carry):
            se, ae, ss = group_stats(g)
            return (carry[0] + se, carry[1] + ae, carry[2] + ss)
        se_acc, ae_acc, ss_acc = jax.lax.fori_loop(
            0, groups_per_block, body,
            (jnp.float32(0.0), jnp.float32(0.0), jnp.float32(0.0)), unroll=4)

    # Per-block partial-stats tile (lane-dense (8,128) store, no resident
    # accumulator across grid steps -> grid axis stays "parallel").
    lane = jax.lax.broadcasted_iota(jnp.int32, (8, 128), 1)
    vals = (jnp.where(lane == 0, se_acc, 0.0)
            + jnp.where(lane == 1, ae_acc, 0.0)
            + jnp.where(lane == 2, ss_acc, 0.0))
    stats_ref[...] = vals[None].astype(jnp.float32)


def _pick_groups_per_block(n_groups, channels, hw, itemsize, *,
                           target_block_bytes, vmem_budget_bytes=24 << 20):
    """Byte-targeted block sizing (review item 1/2/3)."""
    group_bytes = channels * hw * itemsize
    gpb = max(1, int(target_block_bytes) // group_bytes)
    # Double-buffered x block must fit comfortably in VMEM on v5e/v6e/v7x.
    gpb = min(gpb, max(1, vmem_budget_bytes // (2 * group_bytes)))
    # Keep >= 2 blocks when possible so both v7x TensorCores get work.
    gpb = min(gpb, max(1, -(-n_groups // 2)))
    gpb = min(gpb, n_groups)

    # Align block rows (gpb*C) to the dtype's native sublane tiling
    # (8 rows f32, 16 rows bf16) so the x block is layout-clean.
    tile_rows = 8 * max(1, 4 // itemsize)
    sub = tile_rows // math.gcd(tile_rows, channels)
    if gpb % sub != 0:
        if gpb > sub:
            gpb = (gpb // sub) * sub
        elif n_groups >= sub:
            gpb = sub
        else:
            gpb = n_groups           # full-array block: always a legal shape
    return int(gpb)


def _sinusoidal_embedding(t, dim):
    half = dim // 2
    freqs = jnp.exp(-math.log(10000.0) * jnp.arange(half, dtype=jnp.float32)
                    / max(half - 1, 1))
    args = t.astype(jnp.float32)[:, None] * freqs[None, :]
    return jnp.concatenate([jnp.sin(args), jnp.cos(args)], axis=-1)   # (B, dim)


def _time_embedding(t, params):
    # (B, C) time-conditioning bias for the synthetic model (tiny -> JAX glue).
    emb = _sinusoidal_embedding(t, params["w_t"].shape[0])
    return emb @ params["w_t"] + params["b_t"] + params["b_conv"]


def init_params(channels, key=jax.random.PRNGKey(42)):
    k1, k2, k3, k4 = jax.random.split(key, 4)
    scale = 1.0 / math.sqrt(channels)
    return {
        "w_conv": jax.random.normal(k1, (channels, channels), jnp.float32) * scale,
        "b_conv": jax.random.normal(k2, (channels,), jnp.float32) * 0.1,
        "w_t": jax.random.normal(k3, (channels, channels), jnp.float32) * scale,
        "b_t": jax.random.normal(k4, (channels,), jnp.float32) * 0.1,
    }


def gaussian_diffusion_forward(x, t, params, *, input_dtype=jnp.bfloat16,
                               target_block_bytes=2 << 20):
    """JAX/Pallas equivalent of GaussianDiffusion.forward.

    x : (B, T, C, H, W) float32,  t : (B,) int32
    returns (total_loss, mse_loss, ssim_loss, mae, psnr)
    """
    B, T, C, H, W = x.shape
    HW = H * W
    n_groups = B * T

    # Native memory order -> free reshape; frame g = b*T + t occupies rows
    # [g*C, (g+1)*C) with H*W on the lane axis.  Feeding bf16 halves the HBM
    # bytes of the only large stream; the kernel upcasts to f32 for all math.
    # TODO(synk): under jit the cast should fuse into the producer; pass
    # input_dtype=jnp.float32 for exact f32 I/O semantics.
    x2 = x.reshape(n_groups * C, HW)
    if x2.dtype != input_dtype:
        x2 = x2.astype(input_dtype)

    # Per-(frame, channel) time-embedding bias as one contiguous column per
    # block (single tiny DMA per block, no per-group (C,1) micro-tiles).
    temb_bc = _time_embedding(t, params)                                  # (B, C)
    temb_col = jnp.broadcast_to(temb_bc[:, None, :], (B, T, C)).reshape(-1, 1)

    itemsize = jnp.dtype(input_dtype).itemsize
    gpb = _pick_groups_per_block(n_groups, C, HW, itemsize,
                                 target_block_bytes=target_block_bytes)
    n_blocks = pl.cdiv(n_groups, gpb)        # cdiv grid; tail masked in-kernel

    w = params["w_conv"].astype(jnp.float32)
    eye_m = jnp.eye(C, dtype=jnp.float32)

    kernel = functools.partial(_diffusion_stats_kernel, channels=C, hw=HW,
                               groups_per_block=gpb, total_groups=n_groups)

    stats = pl.pallas_call(
        kernel,
        out_shape=jax.ShapeDtypeStruct((n_blocks, 8, 128), jnp.float32),
        grid_spec=pltpu.PrefetchScalarGridSpec(
            num_scalar_prefetch=0,
            grid=(n_blocks,),
            in_specs=[
                pl.BlockSpec((gpb * C, HW), lambda i: (i, 0)),
                pl.BlockSpec((gpb * C, 1), lambda i: (i, 0)),
                pl.BlockSpec((C, C), lambda i: (0, 0)),
                pl.BlockSpec((C, C), lambda i: (0, 0)),
            ],
            out_specs=pl.BlockSpec((1, 8, 128), lambda i: (i, 0, 0)),
        ),
        compiler_params=pltpu.CompilerParams(
            dimension_semantics=("parallel",),   # per-block partials, no carry
            vmem_limit_bytes=32 * 1024 * 1024),
        # pipeline_mode=pl.Buffered(3) on the x spec only if a v7x profile
        # shows exposed DMA between the (now smaller) grid steps.
    )(x2, temb_col, w, eye_m)

    # Tiny scalar epilogue: combine per-block partial sums.
    n_elem = float(B * C * T * H * W)
    se_sum = jnp.sum(stats[:, 0, 0])
    ae_sum = jnp.sum(stats[:, 0, 1])
    ss_sum = jnp.sum(stats[:, 0, 2])

    mse_loss = se_sum / n_elem
    mae_val = ae_sum / n_elem
    ssim_loss = 1.0 - ss_sum / float(B * C * T)
    psnr_val = jnp.where(mse_loss == 0.0, jnp.inf,
                         20.0 * jnp.log10(1.0 / jnp.sqrt(mse_loss)))
    total_loss = mse_loss + 0.5 * ssim_loss
    return total_loss, mse_loss, ssim_loss, mae_val, psnr_val


def _reference_forward(x, t, params, *, input_dtype=jnp.bfloat16):
    # Pure-JAX reference (same math, same input quantization, no Pallas).
    B, T, C, H, W = x.shape
    xq = x.astype(input_dtype).astype(jnp.float32)
    xp = jnp.transpose(xq, (0, 2, 1, 3, 4))
    temb = _time_embedding(t, params)
    pred = (jnp.einsum("ij,bjthw->bithw",
                       params["w_conv"].astype(jnp.float32), xp,
                       precision=jax.lax.Precision.HIGHEST)
            + temb[:, :, None, None, None])
    mse = jnp.mean((pred - xp) ** 2)
    mae_v = jnp.mean(jnp.abs(pred - xp))
    p = pred.reshape(B, C, T, H * W)
    xx = xp.reshape(B, C, T, H * W)
    mu_p, mu_x = p.mean(-1), xx.mean(-1)
    var_p = (p * p).mean(-1) - mu_p ** 2
    var_x = (xx * xx).mean(-1) - mu_x ** 2
    cov = (p * xx).mean(-1) - mu_p * mu_x
    ssim_v = ((2 * mu_p * mu_x + _C1) * (2 * cov + _C2)) / (
        (mu_p ** 2 + mu_x ** 2 + _C1) * (var_p + var_x + _C2))
    ssim_loss = 1.0 - ssim_v.mean()
    psnr_v = 20.0 * jnp.log10(1.0 / jnp.sqrt(mse))
    return mse + 0.5 * ssim_loss, mse, ssim_loss, mae_v, psnr_v


if __name__ == "__main__":
    # B*T = 14 is deliberately non-divisible by the chosen groups-per-block so
    # the cdiv grid + in-kernel tail masking path is exercised, and the grid
    # has >= 2 parallel blocks.
    B, T, C, H, W = 2, 7, 4, 16, 16
    timesteps = 1000

    key = jax.random.PRNGKey(0)
    kx, kt = jax.random.split(key)
    x = jax.random.uniform(kx, (B, T, C, H, W), jnp.float32)     # video batch
    t = jax.random.randint(kt, (B,), 0, timesteps, jnp.int32)    # timestep

    params = init_params(C)

    fwd = jax.jit(gaussian_diffusion_forward)
    out = jax.block_until_ready(fwd(x, t, params))

    ref = _reference_forward(x, t, params)
    for got, want in zip(out, ref):
        if not jnp.allclose(got, want, rtol=5e-3, atol=5e-3):
            raise AssertionError(f"mismatch: {got} vs {want}")

    print("KERNEL_OK")
</pallas_src>

<mosaic_0001>
module attributes {stable_mosaic.version = 11 : i64} {
  func.func @_diffusion_stats_kernel(%arg0: i32, %arg1: memref<16x256xbf16, #tpu.memory_space<vmem>>, %arg2: memref<16x1xf32, #tpu.memory_space<vmem>>, %arg3: memref<4x4xf32, #tpu.memory_space<vmem>>, %arg4: memref<4x4xf32, #tpu.memory_space<vmem>>, %arg5: memref<1x8x128xf32, #tpu.memory_space<vmem>>) attributes {dimension_semantics = [#tpu.dimension_semantics<parallel>], iteration_bounds = array<i64: 4>, scalar_prefetch = 0 : i64, scratch_operands = 0 : i64, tpu.core_type = #tpu.core_type<tc>, window_params = [{transform_indices = @transform_0, window_bounds = array<i64: 16, 256>}, {transform_indices = @transform_1, window_bounds = array<i64: 16, 1>}, {pipeline_mode = #tpu.pipeline_mode<synchronous>, transform_indices = @transform_2, window_bounds = array<i64: 4, 4>}, {pipeline_mode = #tpu.pipeline_mode<synchronous>, transform_indices = @transform_3, window_bounds = array<i64: 4, 4>}, {transform_indices = @transform_4, window_bounds = array<i64: 1, 8, 128>}]} {
    %c4_i32 = arith.constant 4 : i32
    %0 = arith.muli %arg0, %c4_i32 : i32
    %c0 = arith.constant 0 : index
    %c0_0 = arith.constant 0 : index
    %1 = vector.load %arg3[%c0, %c0_0] : memref<4x4xf32, #tpu.memory_space<vmem>>, vector<4x4xf32>
    %c0_1 = arith.constant 0 : index
    %c0_2 = arith.constant 0 : index
    %2 = vector.load %arg4[%c0_1, %c0_2] : memref<4x4xf32, #tpu.memory_space<vmem>>, vector<4x4xf32>
    %3 = arith.subf %1, %2 : vector<4x4xf32>
    %c0_3 = arith.constant 0 : index
    %c0_4 = arith.constant 0 : index
    %4 = vector.load %arg1[%c0_3, %c0_4] : memref<16x256xbf16, #tpu.memory_space<vmem>>, vector<4x256xbf16>
    %5 = arith.extf %4 : vector<4x256xbf16> to vector<4x256xf32>
    %c0_5 = arith.constant 0 : index
    %c0_6 = arith.constant 0 : index
    %6 = vector.load %arg2[%c0_5, %c0_6] : memref<16x1xf32, #tpu.memory_space<vmem>>, vector<4x1xf32>
    %cst = arith.constant dense<0.000000e+00> : vector<4x4xf32>
    %7 = tpu.matmul %5, %5, %cst {dimension_numbers = #tpu.dot_dimension_numbers<[1], [1], [0], [0], [0, 0, 1, 0], [], []>} : vector<4x256xf32>, vector<4x256xf32>, vector<4x4xf32> -> vector<4x4xf32>
    %cst_7 = arith.constant dense<0.000000e+00> : vector<4xf32>
    %8 = vector.multi_reduction <add>, %5, %cst_7 [1] : vector<4x256xf32> to vector<4xf32>
    %9 = vector.shape_cast %8 : vector<4xf32> to vector<4x1xf32>
    %cst_8 = arith.constant dense<0.000000e+00> : vector<4x1xf32>
    %10 = tpu.matmul %1, %9, %cst_8 {dimension_numbers = #tpu.dot_dimension_numbers<[1], [0], [0], [1], [0, 0, 1, 1], [], []>} : vector<4x4xf32>, vector<4x1xf32>, vector<4x1xf32> -> vector<4x1xf32>
    %cst_9 = arith.constant dense<0.000000e+00> : vector<4x4xf32>
    %11 = tpu.matmul %1, %7, %cst_9 {dimension_numbers = #tpu.dot_dimension_numbers<[1], [0], [0], [1], [0, 0, 1, 1], [], []>} : vector<4x4xf32>, vector<4x4xf32>, vector<4x4xf32> -> vector<4x4xf32>
    %12 = arith.mulf %7, %2 : vector<4x4xf32>
    %cst_10 = arith.constant dense<0.000000e+00> : vector<4xf32>
    %13 = vector.multi_reduction <add>, %12, %cst_10 [1] : vector<4x4xf32> to vector<4xf32>
    %14 = vector.shape_cast %13 : vector<4xf32> to vector<4x1xf32>
    %cst_11 = arith.constant 2.560000e+02 : f32
    %15 = vector.broadcast %cst_11 : f32 to vector<4x1xf32>
    %16 = arith.mulf %15, %6 : vector<4x1xf32>
    %17 = arith.addf %10, %16 : vector<4x1xf32>
    %18 = arith.mulf %1, %7 : vector<4x4xf32>
    %cst_12 = arith.constant dense<0.000000e+00> : vector<4xf32>
    %19 = vector.multi_reduction <add>, %18, %cst_12 [1] : vector<4x4xf32> to vector<4xf32>
    %20 = vector.shape_cast %19 : vector<4xf32> to vector<4x1xf32>
    %21 = arith.mulf %6, %9 : vector<4x1xf32>
    %22 = arith.addf %20, %21 : vector<4x1xf32>
    %23 = arith.mulf %11, %1 : vector<4x4xf32>
    %cst_13 = arith.constant dense<0.000000e+00> : vector<4xf32>
    %24 = vector.multi_reduction <add>, %23, %cst_13 [1] : vector<4x4xf32> to vector<4xf32>
    %25 = vector.shape_cast %24 : vector<4xf32> to vector<4x1xf32>
    %cst_14 = arith.constant 2.000000e+00 : f32
    %26 = vector.broadcast %cst_14 : f32 to vector<4x1xf32>
    %27 = arith.mulf %26, %6 : vector<4x1xf32>
    %28 = arith.mulf %27, %10 : vector<4x1xf32>
    %29 = arith.addf %25, %28 : vector<4x1xf32>
    %30 = arith.mulf %6, %6 : vector<4x1xf32>
    %cst_15 = arith.constant 2.560000e+02 : f32
    %31 = vector.broadcast %cst_15 : f32 to vector<4x1xf32>
    %32 = arith.mulf %31, %30 : vector<4x1xf32>
    %33 = arith.addf %29, %32 : vector<4x1xf32>
    %cst_16 = arith.constant dense<0.000000e+00> : vector<4x256xf32>
    %34 = tpu.matmul %3, %5, %cst_16 {dimension_numbers = #tpu.dot_dimension_numbers<[1], [0], [0], [1], [0, 0, 1, 1], [], []>} : vector<4x4xf32>, vector<4x256xf32>, vector<4x256xf32> -> vector<4x256xf32>
    %35 = vector.broadcast %6 : vector<4x1xf32> to vector<4x256xf32>
    %36 = arith.addf %34, %35 : vector<4x256xf32>
    %37 = math.absf %36 : vector<4x256xf32>
    %38 = vector.shape_cast %37 : vector<4x256xf32> to vector<1x4x256xf32>
    %cst_17 = arith.constant dense<0.000000e+00> : vector<1xf32>
    %39 = vector.multi_reduction <add>, %38, %cst_17 [1, 2] : vector<1x4x256xf32> to vector<1xf32>
    %40 = vector.shape_cast %39 : vector<1xf32> to vector<1x1x1xf32>
    %41 = vector.extract %40[0, 0, 0] : f32 from vector<1x1x1xf32>
    %42 = arith.addf %33, %14 : vector<4x1xf32>
    %cst_18 = arith.constant 2.000000e+00 : f32
    %43 = vector.broadcast %cst_18 : f32 to vector<4x1xf32>
    %44 = arith.mulf %43, %22 : vector<4x1xf32>
    %45 = arith.subf %42, %44 : vector<4x1xf32>
    %46 = vector.shape_cast %45 : vector<4x1xf32> to vector<1x4x1xf32>
    %cst_19 = arith.constant dense<0.000000e+00> : vector<1xf32>
    %47 = vector.multi_reduction <add>, %46, %cst_19 [1, 2] : vector<1x4x1xf32> to vector<1xf32>
    %48 = vector.shape_cast %47 : vector<1xf32> to vector<1x1x1xf32>
    %49 = vector.extract %48[0, 0, 0] : f32 from vector<1x1x1xf32>
    %cst_20 = arith.constant 3.906250e-03 : f32
    %50 = vector.broadcast %cst_20 : f32 to vector<4x1xf32>
    %51 = arith.mulf %17, %50 : vector<4x1xf32>
    %cst_21 = arith.constant 3.906250e-03 : f32
    %52 = vector.broadcast %cst_21 : f32 to vector<4x1xf32>
    %53 = arith.mulf %9, %52 : vector<4x1xf32>
    %cst_22 = arith.constant 3.906250e-03 : f32
    %54 = vector.broadcast %cst_22 : f32 to vector<4x1xf32>
    %55 = arith.mulf %33, %54 : vector<4x1xf32>
    %56 = arith.mulf %51, %51 : vector<4x1xf32>
    %57 = arith.subf %55, %56 : vector<4x1xf32>
    %cst_23 = arith.constant 3.906250e-03 : f32
    %58 = vector.broadcast %cst_23 : f32 to vector<4x1xf32>
    %59 = arith.mulf %14, %58 : vector<4x1xf32>
    %60 = arith.mulf %53, %53 : vector<4x1xf32>
    %61 = arith.subf %59, %60 : vector<4x1xf32>
    %cst_24 = arith.constant 3.906250e-03 : f32
    %62 = vector.broadcast %cst_24 : f32 to vector<4x1xf32>
    %63 = arith.mulf %22, %62 : vector<4x1xf32>
    %64 = arith.mulf %51, %53 : vector<4x1xf32>
    %65 = arith.subf %63, %64 : vector<4x1xf32>
    %cst_25 = arith.constant 2.000000e+00 : f32
    %66 = vector.broadcast %cst_25 : f32 to vector<4x1xf32>
    %67 = arith.mulf %66, %51 : vector<4x1xf32>
    %68 = arith.mulf %67, %53 : vector<4x1xf32>
    %cst_26 = arith.constant 9.99999974E-5 : f32
    %69 = vector.broadcast %cst_26 : f32 to vector<4x1xf32>
    %70 = arith.addf %68, %69 : vector<4x1xf32>
    %cst_27 = arith.constant 2.000000e+00 : f32
    %71 = vector.broadcast %cst_27 : f32 to vector<4x1xf32>
    %72 = arith.mulf %71, %65 : vector<4x1xf32>
    %cst_28 = arith.constant 8.99999984E-4 : f32
    %73 = vector.broadcast %cst_28 : f32 to vector<4x1xf32>
    %74 = arith.addf %72, %73 : vector<4x1xf32>
    %75 = arith.mulf %70, %74 : vector<4x1xf32>
    %76 = arith.mulf %51, %51 : vector<4x1xf32>
    %77 = arith.mulf %53, %53 : vector<4x1xf32>
    %78 = arith.addf %76, %77 : vector<4x1xf32>
    %cst_29 = arith.constant 9.99999974E-5 : f32
    %79 = vector.broadcast %cst_29 : f32 to vector<4x1xf32>
    %80 = arith.addf %78, %79 : vector<4x1xf32>
    %81 = arith.addf %57, %61 : vector<4x1xf32>
    %cst_30 = arith.constant 8.99999984E-4 : f32
    %82 = vector.broadcast %cst_30 : f32 to vector<4x1xf32>
    %83 = arith.addf %81, %82 : vector<4x1xf32>
    %84 = arith.mulf %80, %83 : vector<4x1xf32>
    %85 = arith.divf %75, %84 : vector<4x1xf32>
    %86 = vector.shape_cast %85 : vector<4x1xf32> to vector<1x4x1xf32>
    %cst_31 = arith.constant dense<0.000000e+00> : vector<1xf32>
    %87 = vector.multi_reduction <add>, %86, %cst_31 [1, 2] : vector<1x4x1xf32> to vector<1xf32>
    %88 = vector.shape_cast %87 : vector<1xf32> to vector<1x1x1xf32>
    %89 = vector.extract %88[0, 0, 0] : f32 from vector<1x1x1xf32>
    %c0_i32 = arith.constant 0 : i32
    %90 = arith.addi %0, %c0_i32 : i32
    %c14_i32 = arith.constant 14 : i32
    %91 = arith.cmpi slt, %90, %c14_i32 : i32
    %cst_32 = arith.constant 0.000000e+00 : f32
    %92 = arith.select %91, %49, %cst_32 : f32
    %cst_33 = arith.constant 0.000000e+00 : f32
    %93 = arith.select %91, %41, %cst_33 : f32
    %cst_34 = arith.constant 0.000000e+00 : f32
    %94 = arith.select %91, %89, %cst_34 : f32
    %cst_35 = arith.constant 0.000000e+00 : f32
    %95 = arith.addf %cst_35, %92 : f32
    %cst_36 = arith.constant 0.000000e+00 : f32
    %96 = arith.addf %cst_36, %93 : f32
    %cst_37 = arith.constant 0.000000e+00 : f32
    %97 = arith.addf %cst_37, %94 : f32
    %c4 = arith.constant 4 : index
    %c0_38 = arith.constant 0 : index
    %98 = vector.load %arg1[%c4, %c0_38] : memref<16x256xbf16, #tpu.memory_space<vmem>>, vector<4x256xbf16>
    %99 = arith.extf %98 : vector<4x256xbf16> to vector<4x256xf32>
    %c4_39 = arith.constant 4 : index
    %c0_40 = arith.constant 0 : index
    %100 = vector.load %arg2[%c4_39, %c0_40] : memref<16x1xf32, #tpu.memory_space<vmem>>, vector<4x1xf32>
    %cst_41 = arith.constant dense<0.000000e+00> : vector<4x4xf32>
    %101 = tpu.matmul %99, %99, %cst_41 {dimension_numbers = #tpu.dot_dimension_numbers<[1], [1], [0], [0], [0, 0, 1, 0], [], []>} : vector<4x256xf32>, vector<4x256xf32>, vector<4x4xf32> -> vector<4x4xf32>
    %cst_42 = arith.constant dense<0.000000e+00> : vector<4xf32>
    %102 = vector.multi_reduction <add>, %99, %cst_42 [1] : vector<4x256xf32> to vector<4xf32>
    %103 = vector.shape_cast %102 : vector<4xf32> to vector<4x1xf32>
    %cst_43 = arith.constant dense<0.000000e+00> : vector<4x1xf32>
    %104 = tpu.matmul %1, %103, %cst_43 {dimension_numbers = #tpu.dot_dimension_numbers<[1], [0], [0], [1], [0, 0, 1, 1], [], []>} : vector<4x4xf32>, vector<4x1xf32>, vector<4x1xf32> -> vector<4x1xf32>
    %cst_44 = arith.constant dense<0.000000e+00> : vector<4x4xf32>
    %105 = tpu.matmul %1, %101, %cst_44 {dimension_numbers = #tpu.dot_dimension_numbers<[1], [0], [0], [1], [0, 0, 1, 1], [], []>} : vector<4x4xf32>, vector<4x4xf32>, vector<4x4xf32> -> vector<4x4xf32>
    %106 = arith.mulf %101, %2 : vector<4x4xf32>
    %cst_45 = arith.constant dense<0.000000e+00> : vector<4xf32>
    %107 = vector.multi_reduction <add>, %106, %cst_45 [1] : vector<4x4xf32> to vector<4xf32>
    %108 = vector.shape_cast %107 : vector<4xf32> to vector<4x1xf32>
    %cst_46 = arith.constant 2.560000e+02 : f32
    %109 = vector.broadcast %cst_46 : f32 to vector<4x1xf32>
    %110 = arith.mulf %109, %100 : vector<4x1xf32>
    %111 = arith.addf %104, %110 : vector<4x1xf32>
    %112 = arith.mulf %1, %101 : vector<4x4xf32>
    %cst_47 = arith.constant dense<0.000000e+00> : vector<4xf32>
    %113 = vector.multi_reduction <add>, %112, %cst_47 [1] : vector<4x4xf32> to vector<4xf32>
    %114 = vector.shape_cast %113 : vector<4xf32> to vector<4x1xf32>
    %115 = arith.mulf %100, %103 : vector<4x1xf32>
    %116 = arith.addf %114, %115 : vector<4x1xf32>
    %117 = arith.mulf %105, %1 : vector<4x4xf32>
    %cst_48 = arith.constant dense<0.000000e+00> : vector<4xf32>
    %118 = vector.multi_reduction <add>, %117, %cst_48 [1] : vector<4x4xf32> to vector<4xf32>
    %119 = vector.shape_cast %118 : vector<4xf32> to vector<4x1xf32>
    %cst_49 = arith.constant 2.000000e+00 : f32
    %120 = vector.broadcast %cst_49 : f32 to vector<4x1xf32>
    %121 = arith.mulf %120, %100 : vector<4x1xf32>
    %122 = arith.mulf %121, %104 : vector<4x1xf32>
    %123 = arith.addf %119, %122 : vector<4x1xf32>
    %124 = arith.mulf %100, %100 : vector<4x1xf32>
    %cst_50 = arith.constant 2.560000e+02 : f32
    %125 = vector.broadcast %cst_50 : f32 to vector<4x1xf32>
    %126 = arith.mulf %125, %124 : vector<4x1xf32>
    %127 = arith.addf %123, %126 : vector<4x1xf32>
    %cst_51 = arith.constant dense<0.000000e+00> : vector<4x256xf32>
    %128 = tpu.matmul %3, %99, %cst_51 {dimension_numbers = #tpu.dot_dimension_numbers<[1], [0], [0], [1], [0, 0, 1, 1], [], []>} : vector<4x4xf32>, vector<4x256xf32>, vector<4x256xf32> -> vector<4x256xf32>
    %129 = vector.broadcast %100 : vector<4x1xf32> to vector<4x256xf32>
    %130 = arith.addf %128, %129 : vector<4x256xf32>
    %131 = math.absf %130 : vector<4x256xf32>
    %132 = vector.shape_cast %131 : vector<4x256xf32> to vector<1x4x256xf32>
    %cst_52 = arith.constant dense<0.000000e+00> : vector<1xf32>
    %133 = vector.multi_reduction <add>, %132, %cst_52 [1, 2] : vector<1x4x256xf32> to vector<1xf32>
    %134 = vector.shape_cast %133 : vector<1xf32> to vector<1x1x1xf32>
    %135 = vector.extract %134[0, 0, 0] : f32 from vector<1x1x1xf32>
    %136 = arith.addf %127, %108 : vector<4x1xf32>
    %cst_53 = arith.constant 2.000000e+00 : f32
    %137 = vector.broadcast %cst_53 : f32 to vector<4x1xf32>
    %138 = arith.mulf %137, %116 : vector<4x1xf32>
    %139 = arith.subf %136, %138 : vector<4x1xf32>
    %140 = vector.shape_cast %139 : vector<4x1xf32> to vector<1x4x1xf32>
    %cst_54 = arith.constant dense<0.000000e+00> : vector<1xf32>
    %141 = vector.multi_reduction <add>, %140, %cst_54 [1, 2] : vector<1x4x1xf32> to vector<1xf32>
    %142 = vector.shape_cast %141 : vector<1xf32> to vector<1x1x1xf32>
    %143 = vector.extract %142[0, 0, 0] : f32 from vector<1x1x1xf32>
    %cst_55 = arith.constant 3.906250e-03 : f32
    %144 = vector.broadcast %cst_55 : f32 to vector<4x1xf32>
    %145 = arith.mulf %111, %144 : vector<4x1xf32>
    %cst_56 = arith.constant 3.906250e-03 : f32
    %146 = vector.broadcast %cst_56 : f32 to vector<4x1xf32>
    %147 = arith.mulf %103, %146 : vector<4x1xf32>
    %cst_57 = arith.constant 3.906250e-03 : f32
    %148 = vector.broadcast %cst_57 : f32 to vector<4x1xf32>
    %149 = arith.mulf %127, %148 : vector<4x1xf32>
    %150 = arith.mulf %145, %145 : vector<4x1xf32>
    %151 = arith.subf %149, %150 : vector<4x1xf32>
    %cst_58 = arith.constant 3.906250e-03 : f32
    %152 = vector.broadcast %cst_58 : f32 to vector<4x1xf32>
    %153 = arith.mulf %108, %152 : vector<4x1xf32>
    %154 = arith.mulf %147, %147 : vector<4x1xf32>
    %155 = arith.subf %153, %154 : vector<4x1xf32>
    %cst_59 = arith.constant 3.906250e-03 : f32
    %156 = vector.broadcast %cst_59 : f32 to vector<4x1xf32>
    %157 = arith.mulf %116, %156 : vector<4x1xf32>
    %158 = arith.mulf %145, %147 : vector<4x1xf32>
    %159 = arith.subf %157, %158 : vector<4x1xf32>
    %cst_60 = arith.constant 2.000000e+00 : f32
    %160 = vector.broadcast %cst_60 : f32 to vector<4x1xf32>
    %161 = arith.mulf %160, %145 : vector<4x1xf32>
    %162 = arith.mulf %161, %147 : vector<4x1xf32>
    %cst_61 = arith.constant 9.99999974E-5 : f32
    %163 = vector.broadcast %cst_61 : f32 to vector<4x1xf32>
    %164 = arith.addf %162, %163 : vector<4x1xf32>
    %cst_62 = arith.constant 2.000000e+00 : f32
    %165 = vector.broadcast %cst_62 : f32 to vector<4x1xf32>
    %166 = arith.mulf %165, %159 : vector<4x1xf32>
    %cst_63 = arith.constant 8.99999984E-4 : f32
    %167 = vector.broadcast %cst_63 : f32 to vector<4x1xf32>
    %168 = arith.addf %166, %167 : vector<4x1xf32>
    %169 = arith.mulf %164, %168 : vector<4x1xf32>
    %170 = arith.mulf %145, %145 : vector<4x1xf32>
    %171 = arith.mulf %147, %147 : vector<4x1xf32>
    %172 = arith.addf %170, %171 : vector<4x1xf32>
    %cst_64 = arith.constant 9.99999974E-5 : f32
    %173 = vector.broadcast %cst_64 : f32 to vector<4x1xf32>
    %174 = arith.addf %172, %173 : vector<4x1xf32>
    %175 = arith.addf %151, %155 : vector<4x1xf32>
    %cst_65 = arith.constant 8.99999984E-4 : f32
    %176 = vector.broadcast %cst_65 : f32 to vector<4x1xf32>
    %177 = arith.addf %175, %176 : vector<4x1xf32>
    %178 = arith.mulf %174, %177 : vector<4x1xf32>
    %179 = arith.divf %169, %178 : vector<4x1xf32>
    %180 = vector.shape_cast %179 : vector<4x1xf32> to vector<1x4x1xf32>
    %cst_66 = arith.constant dense<0.000000e+00> : vector<1xf32>
    %181 = vector.multi_reduction <add>, %180, %cst_66 [1, 2] : vector<1x4x1xf32> to vector<1xf32>
    %182 = vector.shape_cast %181 : vector<1xf32> to vector<1x1x1xf32>
    %183 = vector.extract %182[0, 0, 0] : f32 from vector<1x1x1xf32>
    %c1_i32 = arith.constant 1 : i32
    %184 = arith.addi %0, %c1_i32 : i32
    %c14_i32_67 = arith.constant 14 : i32
    %185 = arith.cmpi slt, %184, %c14_i32_67 : i32
    %cst_68 = arith.constant 0.000000e+00 : f32
    %186 = arith.select %185, %143, %cst_68 : f32
    %cst_69 = arith.constant 0.000000e+00 : f32
    %187 = arith.select %185, %135, %cst_69 : f32
    %cst_70 = arith.constant 0.000000e+00 : f32
    %188 = arith.select %185, %183, %cst_70 : f32
    %189 = arith.addf %95, %186 : f32
    %190 = arith.addf %96, %187 : f32
    %191 = arith.addf %97, %188 : f32
    %c8 = arith.constant 8 : index
    %c0_71 = arith.constant 0 : index
    %192 = vector.load %arg1[%c8, %c0_71] : memref<16x256xbf16, #tpu.memory_space<vmem>>, vector<4x256xbf16>
    %193 = arith.extf %192 : vector<4x256xbf16> to vector<4x256xf32>
    %c8_72 = arith.constant 8 : index
    %c0_73 = arith.constant 0 : index
    %194 = vector.load %arg2[%c8_72, %c0_73] : memref<16x1xf32, #tpu.memory_space<vmem>>, vector<4x1xf32>
    %cst_74 = arith.constant dense<0.000000e+00> : vector<4x4xf32>
    %195 = tpu.matmul %193, %193, %cst_74 {dimension_numbers = #tpu.dot_dimension_numbers<[1], [1], [0], [0], [0, 0, 1, 0], [], []>} : vector<4x256xf32>, vector<4x256xf32>, vector<4x4xf32> -> vector<4x4xf32>
    %cst_75 = arith.constant dense<0.000000e+00> : vector<4xf32>
    %196 = vector.multi_reduction <add>, %193, %cst_75 [1] : vector<4x256xf32> to vector<4xf32>
    %197 = vector.shape_cast %196 : vector<4xf32> to vector<4x1xf32>
    %cst_76 = arith.constant dense<0.000000e+00> : vector<4x1xf32>
    %198 = tpu.matmul %1, %197, %cst_76 {dimension_numbers = #tpu.dot_dimension_numbers<[1], [0], [0], [1], [0, 0, 1, 1], [], []>} : vector<4x4xf32>, vector<4x1xf32>, vector<4x1xf32> -> vector<4x1xf32>
    %cst_77 = arith.constant dense<0.000000e+00> : vector<4x4xf32>
    %199 = tpu.matmul %1, %195, %cst_77 {dimension_numbers = #tpu.dot_dimension_numbers<[1], [0], [0], [1], [0, 0, 1, 1], [], []>} : vector<4x4xf32>, vector<4x4xf32>, vector<4x4xf32> -> vector<4x4xf32>
    %200 = arith.mulf %195, %2 : vector<4x4xf32>
    %cst_78 = arith.constant dense<0.000000e+00> : vector<4xf32>
    %201 = vector.multi_reduction <add>, %200, %cst_78 [1] : vector<4x4xf32> to vector<4xf32>
    %202 = vector.shape_cast %201 : vector<4xf32> to vector<4x1xf32>
    %cst_79 = arith.constant 2.560000e+02 : f32
    %203 = vector.broadcast %cst_79 : f32 to vector<4x1xf32>
    %204 = arith.mulf %203, %194 : vector<4x1xf32>
    %205 = arith.addf %198, %204 : vector<4x1xf32>
    %206 = arith.mulf %1, %195 : vector<4x4xf32>
    %cst_80 = arith.constant dense<0.000000e+00> : vector<4xf32>
    %207 = vector.multi_reduction <add>, %206, %cst_80 [1] : vector<4x4xf32> to vector<4xf32>
    %208 = vector.shape_cast %207 : vector<4xf32> to vector<4x1xf32>
    %209 = arith.mulf %194, %197 : vector<4x1xf32>
    %210 = arith.addf %208, %209 : vector<4x1xf32>
    %211 = arith.mulf %199, %1 : vector<4x4xf32>
    %cst_81 = arith.constant dense<0.000000e+00> : vector<4xf32>
    %212 = vector.multi_reduction <add>, %211, %cst_81 [1] : vector<4x4xf32> to vector<4xf32>
    %213 = vector.shape_cast %212 : vector<4xf32> to vector<4x1xf32>
    %cst_82 = arith.constant 2.000000e+00 : f32
    %214 = vector.broadcast %cst_82 : f32 to vector<4x1xf32>
    %215 = arith.mulf %214, %194 : vector<4x1xf32>
    %216 = arith.mulf %215, %198 : vector<4x1xf32>
    %217 = arith.addf %213, %216 : vector<4x1xf32>
    %218 = arith.mulf %194, %194 : vector<4x1xf32>
    %cst_83 = arith.constant 2.560000e+02 : f32
    %219 = vector.broadcast %cst_83 : f32 to vector<4x1xf32>
    %220 = arith.mulf %219, %218 : vector<4x1xf32>
    %221 = arith.addf %217, %220 : vector<4x1xf32>
    %cst_84 = arith.constant dense<0.000000e+00> : vector<4x256xf32>
    %222 = tpu.matmul %3, %193, %cst_84 {dimension_numbers = #tpu.dot_dimension_numbers<[1], [0], [0], [1], [0, 0, 1, 1], [], []>} : vector<4x4xf32>, vector<4x256xf32>, vector<4x256xf32> -> vector<4x256xf32>
    %223 = vector.broadcast %194 : vector<4x1xf32> to vector<4x256xf32>
    %224 = arith.addf %222, %223 : vector<4x256xf32>
    %225 = math.absf %224 : vector<4x256xf32>
    %226 = vector.shape_cast %225 : vector<4x256xf32> to vector<1x4x256xf32>
    %cst_85 = arith.constant dense<0.000000e+00> : vector<1xf32>
    %227 = vector.multi_reduction <add>, %226, %cst_85 [1, 2] : vector<1x4x256xf32> to vector<1xf32>
    %228 = vector.shape_cast %227 : vector<1xf32> to vector<1x1x1xf32>
    %229 = vector.extract %228[0, 0, 0] : f32 from vector<1x1x1xf32>
    %230 = arith.addf %221, %202 : vector<4x1xf32>
    %cst_86 = arith.constant 2.000000e+00 : f32
    %231 = vector.broadcast %cst_86 : f32 to vector<4x1xf32>
    %232 = arith.mulf %231, %210 : vector<4x1xf32>
    %233 = arith.subf %230, %232 : vector<4x1xf32>
    %234 = vector.shape_cast %233 : vector<4x1xf32> to vector<1x4x1xf32>
    %cst_87 = arith.constant dense<0.000000e+00> : vector<1xf32>
    %235 = vector.multi_reduction <add>, %234, %cst_87 [1, 2] : vector<1x4x1xf32> to vector<1xf32>
    %236 = vector.shape_cast %235 : vector<1xf32> to vector<1x1x1xf32>
    %237 = vector.extract %236[0, 0, 0] : f32 from vector<1x1x1xf32>
    %cst_88 = arith.constant 3.906250e-03 : f32
    %238 = vector.broadcast %cst_88 : f32 to vector<4x1xf32>
    %239 = arith.mulf %205, %238 : vector<4x1xf32>
    %cst_89 = arith.constant 3.906250e-03 : f32
    %240 = vector.broadcast %cst_89 : f32 to vector<4x1xf32>
    %241 = arith.mulf %197, %240 : vector<4x1xf32>
    %cst_90 = arith.constant 3.906250e-03 : f32
    %242 = vector.broadcast %cst_90 : f32 to vector<4x1xf32>
    %243 = arith.mulf %221, %242 : vector<4x1xf32>
    %244 = arith.mulf %239, %239 : vector<4x1xf32>
    %245 = arith.subf %243, %244 : vector<4x1xf32>
    %cst_91 = arith.constant 3.906250e-03 : f32
    %246 = vector.broadcast %cst_91 : f32 to vector<4x1xf32>
    %247 = arith.mulf %202, %246 : vector<4x1xf32>
    %248 = arith.mulf %241, %241 : vector<4x1xf32>
    %249 = arith.subf %247, %248 : vector<4x1xf32>
    %cst_92 = arith.constant 3.906250e-03 : f32
    %250 = vector.broadcast %cst_92 : f32 to vector<4x1xf32>
    %251 = arith.mulf %210, %250 : vector<4x1xf32>
    %252 = arith.mulf %239, %241 : vector<4x1xf32>
    %253 = arith.subf %251, %252 : vector<4x1xf32>
    %cst_93 = arith.constant 2.000000e+00 : f32
    %254 = vector.broadcast %cst_93 : f32 to vector<4x1xf32>
    %255 = arith.mulf %254, %239 : vector<4x1xf32>
    %256 = arith.mulf %255, %241 : vector<4x1xf32>
    %cst_94 = arith.constant 9.99999974E-5 : f32
    %257 = vector.broadcast %cst_94 : f32 to vector<4x1xf32>
    %258 = arith.addf %256, %257 : vector<4x1xf32>
    %cst_95 = arith.constant 2.000000e+00 : f32
    %259 = vector.broadcast %cst_95 : f32 to vector<4x1xf32>
    %260 = arith.mulf %259, %253 : vector<4x1xf32>
    %cst_96 = arith.constant 8.99999984E-4 : f32
    %261 = vector.broadcast %cst_96 : f32 to vector<4x1xf32>
    %262 = arith.addf %260, %261 : vector<4x1xf32>
    %263 = arith.mulf %258, %262 : vector<4x1xf32>
    %264 = arith.mulf %239, %239 : vector<4x1xf32>
    %265 = arith.mulf %241, %241 : vector<4x1xf32>
    %266 = arith.addf %264, %265 : vector<4x1xf32>
    %cst_97 = arith.constant 9.99999974E-5 : f32
    %267 = vector.broadcast %cst_97 : f32 to vector<4x1xf32>
    %268 = arith.addf %266, %267 : vector<4x1xf32>
    %269 = arith.addf %245, %249 : vector<4x1xf32>
    %cst_98 = arith.constant 8.99999984E-4 : f32
    %270 = vector.broadcast %cst_98 : f32 to vector<4x1xf32>
    %271 = arith.addf %269, %270 : vector<4x1xf32>
    %272 = arith.mulf %268, %271 : vector<4x1xf32>
    %273 = arith.divf %263, %272 : vector<4x1xf32>
    %274 = vector.shape_cast %273 : vector<4x1xf32> to vector<1x4x1xf32>
    %cst_99 = arith.constant dense<0.000000e+00> : vector<1xf32>
    %275 = vector.multi_reduction <add>, %274, %cst_99 [1, 2] : vector<1x4x1xf32> to vector<1xf32>
    %276 = vector.shape_cast %275 : vector<1xf32> to vector<1x1x1xf32>
    %277 = vector.extract %276[0, 0, 0] : f32 from vector<1x1x1xf32>
    %c2_i32 = arith.constant 2 : i32
    %278 = arith.addi %0, %c2_i32 : i32
    %c14_i32_100 = arith.constant 14 : i32
    %279 = arith.cmpi slt, %278, %c14_i32_100 : i32
    %cst_101 = arith.constant 0.000000e+00 : f32
    %280 = arith.select %279, %237, %cst_101 : f32
    %cst_102 = arith.constant 0.000000e+00 : f32
    %281 = arith.select %279, %229, %cst_102 : f32
    %cst_103 = arith.constant 0.000000e+00 : f32
    %282 = arith.select %279, %277, %cst_103 : f32
    %283 = arith.addf %189, %280 : f32
    %284 = arith.addf %190, %281 : f32
    %285 = arith.addf %191, %282 : f32
    %c12 = arith.constant 12 : index
    %c0_104 = arith.constant 0 : index
    %286 = vector.load %arg1[%c12, %c0_104] : memref<16x256xbf16, #tpu.memory_space<vmem>>, vector<4x256xbf16>
    %287 = arith.extf %286 : vector<4x256xbf16> to vector<4x256xf32>
    %c12_105 = arith.constant 12 : index
    %c0_106 = arith.constant 0 : index
    %288 = vector.load %arg2[%c12_105, %c0_106] : memref<16x1xf32, #tpu.memory_space<vmem>>, vector<4x1xf32>
    %cst_107 = arith.constant dense<0.000000e+00> : vector<4x4xf32>
    %289 = tpu.matmul %287, %287, %cst_107 {dimension_numbers = #tpu.dot_dimension_numbers<[1], [1], [0], [0], [0, 0, 1, 0], [], []>} : vector<4x256xf32>, vector<4x256xf32>, vector<4x4xf32> -> vector<4x4xf32>
    %cst_108 = arith.constant dense<0.000000e+00> : vector<4xf32>
    %290 = vector.multi_reduction <add>, %287, %cst_108 [1] : vector<4x256xf32> to vector<4xf32>
    %291 = vector.shape_cast %290 : vector<4xf32> to vector<4x1xf32>
    %cst_109 = arith.constant dense<0.000000e+00> : vector<4x1xf32>
    %292 = tpu.matmul %1, %291, %cst_109 {dimension_numbers = #tpu.dot_dimension_numbers<[1], [0], [0], [1], [0, 0, 1, 1], [], []>} : vector<4x4xf32>, vector<4x1xf32>, vector<4x1xf32> -> vector<4x1xf32>
    %cst_110 = arith.constant dense<0.000000e+00> : vector<4x4xf32>
    %293 = tpu.matmul %1, %289, %cst_110 {dimension_numbers = #tpu.dot_dimension_numbers<[1], [0], [0], [1], [0, 0, 1, 1], [], []>} : vector<4x4xf32>, vector<4x4xf32>, vector<4x4xf32> -> vector<4x4xf32>
    %294 = arith.mulf %289, %2 : vector<4x4xf32>
    %cst_111 = arith.constant dense<0.000000e+00> : vector<4xf32>
    %295 = vector.multi_reduction <add>, %294, %cst_111 [1] : vector<4x4xf32> to vector<4xf32>
    %296 = vector.shape_cast %295 : vector<4xf32> to vector<4x1xf32>
    %cst_112 = arith.constant 2.560000e+02 : f32
    %297 = vector.broadcast %cst_112 : f32 to vector<4x1xf32>
    %298 = arith.mulf %297, %288 : vector<4x1xf32>
    %299 = arith.addf %292, %298 : vector<4x1xf32>
    %300 = arith.mulf %1, %289 : vector<4x4xf32>
    %cst_113 = arith.constant dense<0.000000e+00> : vector<4xf32>
    %301 = vector.multi_reduction <add>, %300, %cst_113 [1] : vector<4x4xf32> to vector<4xf32>
    %302 = vector.shape_cast %301 : vector<4xf32> to vector<4x1xf32>
    %303 = arith.mulf %288, %291 : vector<4x1xf32>
    %304 = arith.addf %302, %303 : vector<4x1xf32>
    %305 = arith.mulf %293, %1 : vector<4x4xf32>
    %cst_114 = arith.constant dense<0.000000e+00> : vector<4xf32>
    %306 = vector.multi_reduction <add>, %305, %cst_114 [1] : vector<4x4xf32> to vector<4xf32>
    %307 = vector.shape_cast %306 : vector<4xf32> to vector<4x1xf32>
    %cst_115 = arith.constant 2.000000e+00 : f32
    %308 = vector.broadcast %cst_115 : f32 to vector<4x1xf32>
    %309 = arith.mulf %308, %288 : vector<4x1xf32>
    %310 = arith.mulf %309, %292 : vector<4x1xf32>
    %311 = arith.addf %307, %310 : vector<4x1xf32>
    %312 = arith.mulf %288, %288 : vector<4x1xf32>
    %cst_116 = arith.constant 2.560000e+02 : f32
    %313 = vector.broadcast %cst_116 : f32 to vector<4x1xf32>
    %314 = arith.mulf %313, %312 : vector<4x1xf32>
    %315 = arith.addf %311, %314 : vector<4x1xf32>
    %cst_117 = arith.constant dense<0.000000e+00> : vector<4x256xf32>
    %316 = tpu.matmul %3, %287, %cst_117 {dimension_numbers = #tpu.dot_dimension_numbers<[1], [0], [0], [1], [0, 0, 1, 1], [], []>} : vector<4x4xf32>, vector<4x256xf32>, vector<4x256xf32> -> vector<4x256xf32>
    %317 = vector.broadcast %288 : vector<4x1xf32> to vector<4x256xf32>
    %318 = arith.addf %316, %317 : vector<4x256xf32>
    %319 = math.absf %318 : vector<4x256xf32>
    %320 = vector.shape_cast %319 : vector<4x256xf32> to vector<1x4x256xf32>
    %cst_118 = arith.constant dense<0.000000e+00> : vector<1xf32>
    %321 = vector.multi_reduction <add>, %320, %cst_118 [1, 2] : vector<1x4x256xf32> to vector<1xf32>
    %322 = vector.shape_cast %321 : vector<1xf32> to vector<1x1x1xf32>
    %323 = vector.extract %322[0, 0, 0] : f32 from vector<1x1x1xf32>
    %324 = arith.addf %315, %296 : vector<4x1xf32>
    %cst_119 = arith.constant 2.000000e+00 : f32
    %325 = vector.broadcast %cst_119 : f32 to vector<4x1xf32>
    %326 = arith.mulf %325, %304 : vector<4x1xf32>
    %327 = arith.subf %324, %326 : vector<4x1xf32>
    %328 = vector.shape_cast %327 : vector<4x1xf32> to vector<1x4x1xf32>
    %cst_120 = arith.constant dense<0.000000e+00> : vector<1xf32>
    %329 = vector.multi_reduction <add>, %328, %cst_120 [1, 2] : vector<1x4x1xf32> to vector<1xf32>
    %330 = vector.shape_cast %329 : vector<1xf32> to vector<1x1x1xf32>
    %331 = vector.extract %330[0, 0, 0] : f32 from vector<1x1x1xf32>
    %cst_121 = arith.constant 3.906250e-03 : f32
    %332 = vector.broadcast %cst_121 : f32 to vector<4x1xf32>
    %333 = arith.mulf %299, %332 : vector<4x1xf32>
    %cst_122 = arith.constant 3.906250e-03 : f32
    %334 = vector.broadcast %cst_122 : f32 to vector<4x1xf32>
    %335 = arith.mulf %291, %334 : vector<4x1xf32>
    %cst_123 = arith.constant 3.906250e-03 : f32
    %336 = vector.broadcast %cst_123 : f32 to vector<4x1xf32>
    %337 = arith.mulf %315, %336 : vector<4x1xf32>
    %338 = arith.mulf %333, %333 : vector<4x1xf32>
    %339 = arith.subf %337, %338 : vector<4x1xf32>
    %cst_124 = arith.constant 3.906250e-03 : f32
    %340 = vector.broadcast %cst_124 : f32 to vector<4x1xf32>
    %341 = arith.mulf %296, %340 : vector<4x1xf32>
    %342 = arith.mulf %335, %335 : vector<4x1xf32>
    %343 = arith.subf %341, %342 : vector<4x1xf32>
    %cst_125 = arith.constant 3.906250e-03 : f32
    %344 = vector.broadcast %cst_125 : f32 to vector<4x1xf32>
    %345 = arith.mulf %304, %344 : vector<4x1xf32>
    %346 = arith.mulf %333, %335 : vector<4x1xf32>
    %347 = arith.subf %345, %346 : vector<4x1xf32>
    %cst_126 = arith.constant 2.000000e+00 : f32
    %348 = vector.broadcast %cst_126 : f32 to vector<4x1xf32>
    %349 = arith.mulf %348, %333 : vector<4x1xf32>
    %350 = arith.mulf %349, %335 : vector<4x1xf32>
    %cst_127 = arith.constant 9.99999974E-5 : f32
    %351 = vector.broadcast %cst_127 : f32 to vector<4x1xf32>
    %352 = arith.addf %350, %351 : vector<4x1xf32>
    %cst_128 = arith.constant 2.000000e+00 : f32
    %353 = vector.broadcast %cst_128 : f32 to vector<4x1xf32>
    %354 = arith.mulf %353, %347 : vector<4x1xf32>
    %cst_129 = arith.constant 8.99999984E-4 : f32
    %355 = vector.broadcast %cst_129 : f32 to vector<4x1xf32>
    %356 = arith.addf %354, %355 : vector<4x1xf32>
    %357 = arith.mulf %352, %356 : vector<4x1xf32>
    %358 = arith.mulf %333, %333 : vector<4x1xf32>
    %359 = arith.mulf %335, %335 : vector<4x1xf32>
    %360 = arith.addf %358, %359 : vector<4x1xf32>
    %cst_130 = arith.constant 9.99999974E-5 : f32
    %361 = vector.broadcast %cst_130 : f32 to vector<4x1xf32>
    %362 = arith.addf %360, %361 : vector<4x1xf32>
    %363 = arith.addf %339, %343 : vector<4x1xf32>
    %cst_131 = arith.constant 8.99999984E-4 : f32
    %364 = vector.broadcast %cst_131 : f32 to vector<4x1xf32>
    %365 = arith.addf %363, %364 : vector<4x1xf32>
    %366 = arith.mulf %362, %365 : vector<4x1xf32>
    %367 = arith.divf %357, %366 : vector<4x1xf32>
    %368 = vector.shape_cast %367 : vector<4x1xf32> to vector<1x4x1xf32>
    %cst_132 = arith.constant dense<0.000000e+00> : vector<1xf32>
    %369 = vector.multi_reduction <add>, %368, %cst_132 [1, 2] : vector<1x4x1xf32> to vector<1xf32>
    %370 = vector.shape_cast %369 : vector<1xf32> to vector<1x1x1xf32>
    %371 = vector.extract %370[0, 0, 0] : f32 from vector<1x1x1xf32>
    %c3_i32 = arith.constant 3 : i32
    %372 = arith.addi %0, %c3_i32 : i32
    %c14_i32_133 = arith.constant 14 : i32
    %373 = arith.cmpi slt, %372, %c14_i32_133 : i32
    %cst_134 = arith.constant 0.000000e+00 : f32
    %374 = arith.select %373, %331, %cst_134 : f32
    %cst_135 = arith.constant 0.000000e+00 : f32
    %375 = arith.select %373, %323, %cst_135 : f32
    %cst_136 = arith.constant 0.000000e+00 : f32
    %376 = arith.select %373, %371, %cst_136 : f32
    %377 = arith.addf %283, %374 : f32
    %378 = arith.addf %284, %375 : f32
    %379 = arith.addf %285, %376 : f32
    %380 = tpu.iota {dimensions = array<i32: 1>} : vector<8x128xi32>
    %c0_i32_137 = arith.constant 0 : i32
    %381 = vector.broadcast %c0_i32_137 : i32 to vector<8x128xi32>
    %382 = arith.cmpi eq, %380, %381 : vector<8x128xi32>
    %cst_138 = arith.constant 0.000000e+00 : f32
    %383 = vector.broadcast %377 : f32 to vector<8x128xf32>
    %384 = vector.broadcast %cst_138 : f32 to vector<8x128xf32>
    %385 = arith.select %382, %383, %384 : vector<8x128xi1>, vector<8x128xf32>
    %c1_i32_139 = arith.constant 1 : i32
    %386 = vector.broadcast %c1_i32_139 : i32 to vector<8x128xi32>
    %387 = arith.cmpi eq, %380, %386 : vector<8x128xi32>
    %cst_140 = arith.constant 0.000000e+00 : f32
    %388 = vector.broadcast %378 : f32 to vector<8x128xf32>
    %389 = vector.broadcast %cst_140 : f32 to vector<8x128xf32>
    %390 = arith.select %387, %388, %389 : vector<8x128xi1>, vector<8x128xf32>
    %391 = arith.addf %385, %390 : vector<8x128xf32>
    %c2_i32_141 = arith.constant 2 : i32
    %392 = vector.broadcast %c2_i32_141 : i32 to vector<8x128xi32>
    %393 = arith.cmpi eq, %380, %392 : vector<8x128xi32>
    %cst_142 = arith.constant 0.000000e+00 : f32
    %394 = vector.broadcast %379 : f32 to vector<8x128xf32>
    %395 = vector.broadcast %cst_142 : f32 to vector<8x128xf32>
    %396 = arith.select %393, %394, %395 : vector<8x128xi1>, vector<8x128xf32>
    %397 = arith.addf %391, %396 : vector<8x128xf32>
    %398 = vector.shape_cast %397 : vector<8x128xf32> to vector<1x8x128xf32>
    %c0_143 = arith.constant 0 : index
    %c0_144 = arith.constant 0 : index
    %c0_145 = arith.constant 0 : index
    %399 = vector.load %arg5[%c0_143, %c0_144, %c0_145] : memref<1x8x128xf32, #tpu.memory_space<vmem>>, vector<1x8x128xf32>
    tpu.vector_store %arg5[%c0_143, %c0_144, %c0_145], %398 {strides = array<i32>} : memref<1x8x128xf32, #tpu.memory_space<vmem>>, vector<1x8x128xf32>,
    return
  }
  func.func @transform_0(%arg0: i32) -> (i32, i32) {
    %c0_i32 = arith.constant 0 : i32
    %c0_i32_0 = arith.constant 0 : i32
    return %arg0, %c0_i32 : i32, i32
  }
  func.func @transform_1(%arg0: i32) -> (i32, i32) {
    %c0_i32 = arith.constant 0 : i32
    %c0_i32_0 = arith.constant 0 : i32
    return %arg0, %c0_i32 : i32, i32
  }
  func.func @transform_2(%arg0: i32) -> (i32, i32) {
    %c0_i32 = arith.constant 0 : i32
    %c0_i32_0 = arith.constant 0 : i32
    %c0_i32_1 = arith.constant 0 : i32
    return %c0_i32, %c0_i32_0 : i32, i32
  }
  func.func @transform_3(%arg0: i32) -> (i32, i32) {
    %c0_i32 = arith.constant 0 : i32
    %c0_i32_0 = arith.constant 0 : i32
    %c0_i32_1 = arith.constant 0 : i32
    return %c0_i32, %c0_i32_0 : i32, i32
  }
  func.func @transform_4(%arg0: i32) -> (i32, i32, i32) {
    %c0_i32 = arith.constant 0 : i32
    %c0_i32_0 = arith.constant 0 : i32
    %c0_i32_1 = arith.constant 0 : i32
    return %arg0, %c0_i32, %c0_i32_0 : i32, i32, i32
  }
}

</mosaic_0001>

<llo_original>
// kernel: gaussian_diffusion_forward.1
$region0: #{gaussian_diffusion_forward.1}
  #allocation0 [shape = 'u32[]', space=smem, size = 0x4, offset = 0x4, fixed_abs, tag = 'smem constant byte address 0x4 - core index']
  #allocation1 [shape = 'u32[144,128]{1,0:T(1,128)}', space=vmem, size = 0x12000, scoped, tag = 'internal scratch']
  %s0 = inlined_call_operand.vmem [shape: bf16[56,256], index: 0, kind: input, shape index: {}]
  %s1 = inlined_call_operand.vmem [shape: f32[56,1], index: 1, kind: input, shape index: {}]
  %s2 = inlined_call_operand.vmem [shape: f32[4,4], index: 2, kind: input, shape index: {}]
  %s3 = inlined_call_operand.vmem [shape: f32[4,4], index: 3, kind: input, shape index: {}]
  %s4 = inlined_call_operand.vmem [shape: f32[4,8,128], index: 4, kind: output, shape index: {}]
  %s5 = sld [smem:[#allocation0]]
  $region49: #{gaussian_diffusion_forward.1} parent=0
    _
  %s7 = ssub.s32 1, %s5
  %s8 = scalar_select 0, %s7, %s5
  loop: start=0, step=1, limit=6
  $region2: #{gaussian_diffusion_forward.1} parent=0 // loop_pre_header
    _
  $region3: #{gaussian_diffusion_forward.1} parent=0 // loop_header
    %s10 = sphi 0, %s14
    %p11 = scmp.ge.s32.totalorder %s10, 6
    %s20 = sphi 0, %s22
    %s23 = sphi 0, %s20
    %s24 = sphi 0, %s23
    %s40 = sphi 0, %s24
    %s46 = sphi 0, %s48
    %s49 = sphi 0, %s46
    %s50 = sphi 0, %s49
    %s66 = sphi 0, %s50
    %s70 = sphi 0, %s70
    %s72 = sphi 0, %s70
    %s73 = sphi 0, %s72
    %s87 = sphi 0, %s73
    %s91 = sphi 0, %s91
    %s93 = sphi 0, %s91
    %s94 = sphi 0, %s93
    %s108 = sphi 0, %s94
    %s114 = sphi 0, %s116
    %s117 = sphi 0, %s114
    %s118 = sphi 0, %s117
    %s134 = sphi 0, %s118
  $region4: #{gaussian_diffusion_forward.1} parent=0 // loop_header_branch
    %13 = sbr.rel (%p11) target = $region8
  $region5: #{gaussian_diffusion_forward.1} parent=0 // loop_body
    %s15 = ssub.s32 %s10, 1
    %s16 = ssub.s32 %s10, 2
    %s17 = sadd.s32 %s10, 1
    %s18 = ssub.s32 %s10, %s17
    %p19 = scmp.eq.s32.totalorder %s18, 0
    %s21 = sadd.s32 %s20, 1
    %s22 = scalar_select %p19, %s20, %s21
    %p25 = pneg %p19
    %p26 = scmp.eq.s32.totalorder %s10, 3
    %p27 = por %p25, %p26
    %p28 = scmp.ne.s32.totalorder %s20, %s23
    %p29 = scmp.eq.s32.totalorder %s10, 0
    %p30 = por %p28, %p29
    %p31 = scmp.ne.s32.totalorder %s20, %s23
    %p32 = scmp.eq.s32.totalorder %s15, 3
    %p33 = por %p31, %p32
    %p34 = scmp.ne.s32.totalorder %s23, %s24
    %p35 = scmp.eq.s32.totalorder %s15, 0
    %p36 = por %p34, %p35
    %p37 = scmp.ne.s32.totalorder %s23, %s24
    %p38 = scmp.eq.s32.totalorder %s16, 3
    %p39 = por %p37, %p38
    %p41 = scmp.ne.s32.totalorder %s24, %s40
    %p42 = scmp.eq.s32.totalorder %s16, 0
    %p43 = por %p41, %p42
    %s44 = ssub.s32 %s10, %s17
    %p45 = scmp.eq.s32.totalorder %s44, 0
    %s47 = sadd.s32 %s46, 1
    %s48 = scalar_select %p45, %s46, %s47
    %p51 = pneg %p45
    %p52 = scmp.eq.s32.totalorder %s10, 3
    %p53 = por %p51, %p52
    %p54 = scmp.ne.s32.totalorder %s46, %s49
    %p55 = scmp.eq.s32.totalorder %s10, 0
    %p56 = por %p54, %p55
    %p57 = scmp.ne.s32.totalorder %s46, %s49
    %p58 = scmp.eq.s32.totalorder %s15, 3
    %p59 = por %p57, %p58
    %p60 = scmp.ne.s32.totalorder %s49, %s50
    %p61 = scmp.eq.s32.totalorder %s15, 0
    %p62 = por %p60, %p61
    %p63 = scmp.ne.s32.totalorder %s49, %s50
    %p64 = scmp.eq.s32.totalorder %s16, 3
    %p65 = por %p63, %p64
    %p67 = scmp.ne.s32.totalorder %s50, %s66
    %p68 = scmp.eq.s32.totalorder %s16, 0
    %p69 = por %p67, %p68
    %s71 = sadd.s32 %s70, 1
    %p74 = scmp.eq.s32.totalorder %s10, 3
    %p75 = scmp.ne.s32.totalorder %s70, %s72
    %p76 = scmp.eq.s32.totalorder %s10, 0
    %p77 = por %p75, %p76
    %p78 = scmp.ne.s32.totalorder %s70, %s72
    %p79 = scmp.eq.s32.totalorder %s15, 3
    %p80 = por %p78, %p79
    %p81 = scmp.ne.s32.totalorder %s72, %s73
    %p82 = scmp.eq.s32.totalorder %s15, 0
    %p83 = por %p81, %p82
    %p84 = scmp.ne.s32.totalorder %s72, %s73
    %p85 = scmp.eq.s32.totalorder %s16, 3
    %p86 = por %p84, %p85
    %p88 = scmp.ne.s32.totalorder %s73, %s87
    %p89 = scmp.eq.s32.totalorder %s16, 0
    %p90 = por %p88, %p89
    %s92 = sadd.s32 %s91, 1
    %p95 = scmp.eq.s32.totalorder %s10, 3
    %p96 = scmp.ne.s32.totalorder %s91, %s93
    %p97 = scmp.eq.s32.totalorder %s10, 0
    %p98 = por %p96, %p97
    %p99 = scmp.ne.s32.totalorder %s91, %s93
    %p100 = scmp.eq.s32.totalorder %s15, 3
    %p101 = por %p99, %p100
    %p102 = scmp.ne.s32.totalorder %s93, %s94
    %p103 = scmp.eq.s32.totalorder %s15, 0
    %p104 = por %p102, %p103
    %p105 = scmp.ne.s32.totalorder %s93, %s94
    %p106 = scmp.eq.s32.totalorder %s16, 3
    %p107 = por %p105, %p106
    %p109 = scmp.ne.s32.totalorder %s94, %s108
    %p110 = scmp.eq.s32.totalorder %s16, 0
    %p111 = por %p109, %p110
    %s112 = ssub.s32 %s10, %s17
    %p113 = scmp.eq.s32.totalorder %s112, 0
    %s115 = sadd.s32 %s114, 1
    %s116 = scalar_select %p113, %s114, %s115
    %p119 = pneg %p113
    %p120 = scmp.eq.s32.totalorder %s10, 3
    %p121 = por %p119, %p120
    %p122 = scmp.ne.s32.totalorder %s114, %s117
    %p123 = scmp.eq.s32.totalorder %s10, 0
    %p124 = por %p122, %p123
    %p125 = scmp.ne.s32.totalorder %s114, %s117
    %p126 = scmp.eq.s32.totalorder %s15, 3
    %p127 = por %p125, %p126
    %p128 = scmp.ne.s32.totalorder %s117, %s118
    %p129 = scmp.eq.s32.totalorder %s15, 0
    %p130 = por %p128, %p129
    %p131 = scmp.ne.s32.totalorder %s117, %s118
    %p132 = scmp.eq.s32.totalorder %s16, 3
    %p133 = por %p131, %p132
    %p135 = scmp.ne.s32.totalorder %s118, %s134
    %p136 = scmp.eq.s32.totalorder %s16, 0
    %p137 = por %p135, %p136
    %p138 = scmp.le.s32.totalorder 1, %s10
    %p139 = scmp.lt.s32.totalorder %s10, 5
    %p140 = pnand %p138, %p139
    %p141 = pneg %p140
    // Predicated region
    $region9: #{gaussian_diffusion_forward.1} parent=5 // pred_check
      _
    $region10: #{gaussian_diffusion_forward.1} parent=5 // pred_check_branch
      %143 = sbr.rel (%p140) target = $region12
    $region11: #{gaussian_diffusion_forward.1} parent=5 // pred_region
      %s144 = ssub.s32 %s10, 1
      // Predicated region
      $region13: #{gaussian_diffusion_forward.1} parent=11 // pred_check
        %p145 = pneg %p83
      $region14: #{gaussian_diffusion_forward.1} parent=11 // pred_check_branch
        %147 = sbr.rel (%p145) target = $region16
      $region15: #{gaussian_diffusion_forward.1} parent=11 // pred_region
        _
      $region16: #{gaussian_diffusion_forward.1} parent=11 // pred_fallthru
        _
      // Predicated region
      $region17: #{gaussian_diffusion_forward.1} parent=11 // pred_check
        %p148 = pneg %p104
      $region18: #{gaussian_diffusion_forward.1} parent=11 // pred_check_branch
        %150 = sbr.rel (%p148) target = $region20
      $region19: #{gaussian_diffusion_forward.1} parent=11 // pred_region
        _
      $region20: #{gaussian_diffusion_forward.1} parent=11 // pred_fallthru
        _
    $region12: #{gaussian_diffusion_forward.1} parent=5 // pred_fallthru
      _
    %p151 = scmp.lt.s32.totalorder %s10, 4
    // Predicated region
    $region21: #{gaussian_diffusion_forward.1} parent=5 // pred_check
      %p152 = pneg %p151
    $region22: #{gaussian_diffusion_forward.1} parent=5 // pred_check_branch
      %154 = sbr.rel (%p152) target = $region24
    $region23: #{gaussian_diffusion_forward.1} parent=5 // pred_region
      // Predicated region
      $region25: #{gaussian_diffusion_forward.1} parent=23 // pred_check
        %p155 = pneg %p30
      $region26: #{gaussian_diffusion_forward.1} parent=23 // pred_check_branch
        %157 = sbr.rel (%p155) target = $region28
      $region27: #{gaussian_diffusion_forward.1} parent=23 // pred_region
        %s158 = smul.u32 2, %s10
        %s159 = ssub.s32 7, %s158
        %p160 = scmp.lt.s32.totalorder %s159, 2
        %s161 = scalar_select %p160, %s159, 2
        %s162 = smul.u32 64, %s161
        %s163 = smul.u32 %s162, 2
        %p164 = scmp.lt.s32.totalorder %s158, 6
        %s165 = scalar_select %p164, %s158, 6
        %s166 = smul.addr %s165, 2
        %s167 = smul.addr %s166, 4
        %s168 = scalar_lea.vmem %s0, %s167
        %s169 = smul.u32 2, %s10
        %s170 = ssub.s32 7, %s169
        %p171 = scmp.lt.s32.totalorder %s170, 2
        %s172 = scalar_select %p171, %s170, 2
        %s173 = smul.u32 64, %s172
        %s174 = smul.u32 %s173, 2
      $region28: #{gaussian_diffusion_forward.1} parent=23 // pred_fallthru
        _
      // Predicated region
      $region29: #{gaussian_diffusion_forward.1} parent=23 // pred_check
        %p175 = pneg %p56
      $region30: #{gaussian_diffusion_forward.1} parent=23 // pred_check_branch
        %177 = sbr.rel (%p175) target = $region32
      $region31: #{gaussian_diffusion_forward.1} parent=23 // pred_region
        %s178 = smul.u32 2, %s10
        %s179 = ssub.s32 7, %s178
        %p180 = scmp.lt.s32.totalorder %s179, 2
        %s181 = scalar_select %p180, %s179, 2
        %s182 = smul.u32 128, %s181
        %p183 = scmp.lt.s32.totalorder %s178, 6
        %s184 = scalar_select %p183, %s178, 6
        %s185 = smul.addr %s184, 8
        %s186 = scalar_lea.vmem %s1, %s185
        %s187 = smul.u32 2, %s10
        %s188 = ssub.s32 7, %s187
        %p189 = scmp.lt.s32.totalorder %s188, 2
        %s190 = scalar_select %p189, %s188, 2
        %s191 = smul.u32 128, %s190
      $region32: #{gaussian_diffusion_forward.1} parent=23 // pred_fallthru
        _
    $region24: #{gaussian_diffusion_forward.1} parent=5 // pred_fallthru
      _
    %p192 = scmp.le.s32.totalorder 1, %s10
    %p193 = scmp.lt.s32.totalorder %s10, 5
    %p194 = pnand %p192, %p193
    %p195 = pneg %p194
    // Predicated region
    $region33: #{gaussian_diffusion_forward.1} parent=5 // pred_check
      _
    $region34: #{gaussian_diffusion_forward.1} parent=5 // pred_check_branch
      %197 = sbr.rel (%p194) target = $region36
    $region35: #{gaussian_diffusion_forward.1} parent=5 // pred_region
      %s198 = ssub.s32 %s10, 1
      %s199 = smul.u32 2, %s15
      %s200 = ssub.s32 7, %s199
      %p201 = scmp.lt.s32.totalorder %s200, 2
      %s202 = scalar_select %p201, %s200, 2
      %s203 = smul.u32 64, %s202
      %s204 = smul.u32 %s203, 2
      %p205 = scmp.lt.s32.totalorder %s199, 6
      %s206 = scalar_select %p205, %s199, 6
      %s207 = smul.addr %s206, 2
      %s208 = smul.addr %s207, 4
      %s209 = scalar_lea.vmem %s0, %s208
      %p210 = pneg %p36
      %p211 = pneg %p33
      %s212 = smul.u32 2, %s15
      %s213 = ssub.s32 7, %s212
      %p214 = scmp.lt.s32.totalorder %s213, 2
      %s215 = scalar_select %p214, %s213, 2
      %s216 = smul.u32 128, %s215
      %p217 = scmp.lt.s32.totalorder %s212, 6
      %s218 = scalar_select %p217, %s212, 6
      %s219 = smul.addr %s218, 8
      %s220 = scalar_lea.vmem %s1, %s219
      %p221 = pneg %p62
      %p222 = pneg %p59
      %p223 = pneg %p83
      %p224 = pneg %p80
      %p225 = pneg %p104
      %p226 = pneg %p101
      %p227 = pneg %p130
      %p228 = pneg %p127
      %p229 = scmp.lt.s32.totalorder %s15, 3
      %s230 = scalar_select %p229, %s15, 3
      %s231 = smul.addr %s230, 8
      %s232 = scalar_lea.vmem %s4, %s231
      %s233 = smul.u32 2, %s15
      %s234 = ssub.s32 7, %s233
      %p235 = scmp.lt.s32.totalorder %s234, 2
      %s236 = scalar_select %p235, %s234, 2
      %s237 = smul.u32 64, %s236
      %s238 = smul.u32 %s237, 2
      %p239 = scmp.lt.s32.totalorder %s233, 6
      %s240 = scalar_select %p239, %s233, 6
      %s241 = smul.addr %s240, 2
      %s242 = smul.addr %s241, 4
      %s243 = scalar_lea.vmem %s0, %s242
      %s244 = smul.u32 2, %s15
      %s245 = ssub.s32 7, %s244
      %p246 = scmp.lt.s32.totalorder %s245, 2
      %s247 = scalar_select %p246, %s245, 2
      %s248 = smul.u32 64, %s247
      %s249 = smul.u32 %s248, 2
      %s250 = smul.u32 2, %s15
      %s251 = ssub.s32 7, %s250
      %p252 = scmp.lt.s32.totalorder %s251, 2
      %s253 = scalar_select %p252, %s251, 2
      %s254 = smul.u32 128, %s253
      %p255 = scmp.lt.s32.totalorder %s250, 6
      %s256 = scalar_select %p255, %s250, 6
      %s257 = smul.addr %s256, 8
      %s258 = scalar_lea.vmem %s1, %s257
      %s259 = smul.u32 2, %s15
      %s260 = ssub.s32 7, %s259
      %p261 = scmp.lt.s32.totalorder %s260, 2
      %s262 = scalar_select %p261, %s260, 2
      %s263 = smul.u32 128, %s262
      %p264 = scmp.lt.s32.totalorder %s15, 3
      %s265 = scalar_select %p264, %s15, 3
      %s266 = smul.addr %s265, 8
      %s267 = scalar_lea.vmem %s4, %s266
      %s268 = smul.u32 %s15, 4
      %v269 = vld [vmem:[%s2] sm:$0xf]
      %v270 = vld [vmem:[%s3] sm:$0xf]
      %v271 = vsub.f32 %v269, %v270
      %v272 = vld [vmem:[%s243] sm:$0x33]
      %v273 = vunpack.c.l.bf16 %v272
      %v274 = vunpack.c.h.bf16 %v272
      %v275 = vld [vmem:[%s258] sm:$0xf]
      %276 = vmatprep.subr.mxu0 %v274
      %277 = vmatpush1.xpose.msra.mxu0 %v273
      %278 = vmatprep.subr.mxu0 0.0
      %279 = vmatpush1.xpose.msra.mxu0 0.0
      %280 = vmatprep.subr.mxu0 0.0
      %281 = vmatpush1.xpose.msra.mxu0 0.0
      %282 = vmatprep.subr.mxu0 0.0
      %283 = vmatpush1.xpose.msra.mxu0 0.0
      %284 = vmatprep.subr.mxu0 0.0
      %285 = vmatpush1.xpose.msra.mxu0 0.0
      %286 = vmatprep.subr.mxu0 0.0
      %287 = vmatpush1.xpose.msra.mxu0 0.0
      %288 = vmatprep.subr.mxu0 0.0
      %289 = vmatpush1.xpose.msra.mxu0 0.0
      %290 = vmatprep.subr.mxu0 0.0
      %291 = vmatpush1.xpose.msra.mxu0 0.0
      %292 = vmatprep.subr.mxu0 0.0
      %293 = vmatpush1.xpose.msra.mxu0 0.0
      %294 = vmatprep.subr.mxu0 0.0
      %295 = vmatpush1.xpose.msra.mxu0 0.0
      %296 = vmatprep.subr.mxu0 0.0
      %297 = vmatpush1.xpose.msra.mxu0 0.0
      %298 = vmatprep.subr.mxu0 0.0
      %299 = vmatpush1.xpose.msra.mxu0 0.0
      %300 = vmatprep.subr.mxu0 0.0
      %301 = vmatpush1.xpose.msra.mxu0 0.0
      %302 = vmatprep.subr.mxu0 0.0
      %303 = vmatpush1.xpose.msra.mxu0 0.0
      %304 = vmatprep.subr.mxu0 0.0
      %305 = vmatpush1.xpose.msra.mxu0 0.0
      %306 = vmatprep.subr.mxu0 0.0
      %307 = vmatpush1.xpose.msra.mxu0 0.0
      %308 = vmatprep.subr.mxu0 0.0
      %309 = vmatpush1.xpose.msra.mxu0 0.0
      %310 = vmatprep.subr.mxu0 0.0
      %311 = vmatpush1.xpose.msra.mxu0 0.0
      %312 = vmatprep.subr.mxu0 0.0
      %313 = vmatpush1.xpose.msra.mxu0 0.0
      %314 = vmatprep.subr.mxu0 0.0
      %315 = vmatpush1.xpose.msra.mxu0 0.0
      %316 = vmatprep.subr.mxu0 0.0
      %317 = vmatpush1.xpose.msra.mxu0 0.0
      %318 = vmatprep.subr.mxu0 0.0
      %319 = vmatpush1.xpose.msra.mxu0 0.0
      %320 = vmatprep.subr.mxu0 0.0
      %321 = vmatpush1.xpose.msra.mxu0 0.0
      %322 = vmatprep.subr.mxu0 0.0
      %323 = vmatpush1.xpose.msra.mxu0 0.0
      %324 = vmatprep.subr.mxu0 0.0
      %325 = vmatpush1.xpose.msra.mxu0 0.0
      %326 = vmatprep.subr.mxu0 0.0
      %327 = vmatpush1.xpose.msra.mxu0 0.0
      %328 = vmatprep.subr.mxu0 0.0
      %329 = vmatpush1.xpose.msra.mxu0 0.0
      %330 = vmatprep.subr.mxu0 0.0
      %331 = vmatpush1.xpose.msra.mxu0 0.0
      %332 = vmatprep.subr.mxu0 0.0
      %333 = vmatpush1.xpose.msra.mxu0 0.0
      %334 = vmatprep.subr.mxu0 0.0
      %335 = vmatpush1.xpose.msra.mxu0 0.0
      %336 = vmatprep.subr.mxu0 0.0
      %337 = vmatpush1.xpose.msra.mxu0 0.0
      %338 = vmatprep.subr.mxu0 0.0
      %339 = vmatpush1.xpose.msra.mxu0 0.0
      %340 = vmatprep.mubr.f32.mxu0 %v274
      %341 = vmatmul.mubr.f32.gmra.mrb[0].mxu0 %v273
      %v342 = vpop.f32.mrb[0].mxu0
      %v343 = vadd.f32 0.0, %v342
      %v344 = vpop.f32.mrb[0].mxu0
      %345 = vdwg.mxu0
      %vm346 = vcmask 1043456
      %v347 = vsel %vm346, %v273, 0.0
      %v348 = vsel %vm346, %v274, 0.0
      %v349 = vadd.f32 %v347, %v348
      %350 = vadd.xlane.f32.xlu0 %v349
      %v351 = vpop.xlane.xlu0 %350
      %vm352 = vcmask 31744
      %v354 = vsel %vm352, %v269, 0
      %v357 = vsel %vm346, %v351, 0
      %359 = vmatprep.subr.mxu0 0.0
      %360 = vmatpush1.msra.mxu0 %v357
      %361 = vmatprep.subr.mxu0 0.0
      %362 = vmatpush1.msra.mxu0 0.0
      %363 = vmatprep.subr.mxu0 0.0
      %364 = vmatpush1.msra.mxu0 0.0
      %365 = vmatprep.subr.mxu0 0.0
      %366 = vmatpush1.msra.mxu0 0.0
      %367 = vmatprep.subr.mxu0 0.0
      %368 = vmatpush1.msra.mxu0 0.0
      %369 = vmatprep.subr.mxu0 0.0
      %370 = vmatpush1.msra.mxu0 0.0
      %371 = vmatprep.subr.mxu0 0.0
      %372 = vmatpush1.msra.mxu0 0.0
      %373 = vmatprep.subr.mxu0 0.0
      %374 = vmatpush1.msra.mxu0 0.0
      %375 = vmatprep.subr.mxu0 0.0
      %376 = vmatpush1.msra.mxu0 0.0
      %377 = vmatprep.subr.mxu0 0.0
      %378 = vmatpush1.msra.mxu0 0.0
      %379 = vmatprep.subr.mxu0 0.0
      %380 = vmatpush1.msra.mxu0 0.0
      %381 = vmatprep.subr.mxu0 0.0
      %382 = vmatpush1.msra.mxu0 0.0
      %383 = vmatprep.subr.mxu0 0.0
      %384 = vmatpush1.msra.mxu0 0.0
      %385 = vmatprep.subr.mxu0 0.0
      %386 = vmatpush1.msra.mxu0 0.0
      %387 = vmatprep.subr.mxu0 0.0
      %388 = vmatpush1.msra.mxu0 0.0
      %389 = vmatprep.subr.mxu0 0.0
      %390 = vmatpush1.msra.mxu0 0.0
      %391 = vmatprep.subr.mxu0 0.0
      %392 = vmatpush1.msra.mxu0 0.0
      %393 = vmatprep.subr.mxu0 0.0
      %394 = vmatpush1.msra.mxu0 0.0
      %395 = vmatprep.subr.mxu0 0.0
      %396 = vmatpush1.msra.mxu0 0.0
      %397 = vmatprep.subr.mxu0 0.0
      %398 = vmatpush1.msra.mxu0 0.0
      %399 = vmatprep.subr.mxu0 0.0
      %400 = vmatpush1.msra.mxu0 0.0
      %401 = vmatprep.subr.mxu0 0.0
      %402 = vmatpush1.msra.mxu0 0.0
      %403 = vmatprep.subr.mxu0 0.0
      %404 = vmatpush1.msra.mxu0 0.0
      %405 = vmatprep.subr.mxu0 0.0
      %406 = vmatpush1.msra.mxu0 0.0
      %407 = vmatprep.subr.mxu0 0.0
      %408 = vmatpush1.msra.mxu0 0.0
      %409 = vmatprep.subr.mxu0 0.0
      %410 = vmatpush1.msra.mxu0 0.0
      %411 = vmatprep.subr.mxu0 0.0
      %412 = vmatpush1.msra.mxu0 0.0
      %413 = vmatprep.subr.mxu0 0.0
      %414 = vmatpush1.msra.mxu0 0.0
      %415 = vmatprep.subr.mxu0 0.0
      %416 = vmatpush1.msra.mxu0 0.0
      %417 = vmatprep.subr.mxu0 0.0
      %418 = vmatpush1.msra.mxu0 0.0
      %419 = vmatprep.subr.mxu0 0.0
      %420 = vmatpush1.msra.mxu0 0.0
      %421 = vmatprep.subr.mxu0 0.0
      %422 = vmatpush1.msra.mxu0 0.0
      %423 = vmatprep.mubr.f32.mxu0 0.0
      %424 = vmatmul.mubr.f32.gmra.mrb[0].mxu0 %v354
      %v425 = vpop.f32.mrb[0].mxu0
      %v426 = vadd.f32 0.0, %v425
      %v427 = vpop.f32.mrb[0].mxu0
      %428 = vdwg.mxu0
      %v430 = vsel %vm346, %v343, 0
      %432 = vmatprep.subr.mxu0 0.0
      %433 = vmatpush1.msra.mxu0 %v430
      %434 = vmatprep.subr.mxu0 0.0
      %435 = vmatpush1.msra.mxu0 0.0
      %436 = vmatprep.subr.mxu0 0.0
      %437 = vmatpush1.msra.mxu0 0.0
      %438 = vmatprep.subr.mxu0 0.0
      %439 = vmatpush1.msra.mxu0 0.0
      %440 = vmatprep.subr.mxu0 0.0
      %441 = vmatpush1.msra.mxu0 0.0
      %442 = vmatprep.subr.mxu0 0.0
      %443 = vmatpush1.msra.mxu0 0.0
      %444 = vmatprep.subr.mxu0 0.0
      %445 = vmatpush1.msra.mxu0 0.0
      %446 = vmatprep.subr.mxu0 0.0
      %447 = vmatpush1.msra.mxu0 0.0
      %448 = vmatprep.subr.mxu0 0.0
      %449 = vmatpush1.msra.mxu0 0.0
      %450 = vmatprep.subr.mxu0 0.0
      %451 = vmatpush1.msra.mxu0 0.0
      %452 = vmatprep.subr.mxu0 0.0
      %453 = vmatpush1.msra.mxu0 0.0
      %454 = vmatprep.subr.mxu0 0.0
      %455 = vmatpush1.msra.mxu0 0.0
      %456 = vmatprep.subr.mxu0 0.0
      %457 = vmatpush1.msra.mxu0 0.0
      %458 = vmatprep.subr.mxu0 0.0
      %459 = vmatpush1.msra.mxu0 0.0
      %460 = vmatprep.subr.mxu0 0.0
      %461 = vmatpush1.msra.mxu0 0.0
      %462 = vmatprep.subr.mxu0 0.0
      %463 = vmatpush1.msra.mxu0 0.0
      %464 = vmatprep.subr.mxu0 0.0
      %465 = vmatpush1.msra.mxu0 0.0
      %466 = vmatprep.subr.mxu0 0.0
      %467 = vmatpush1.msra.mxu0 0.0
      %468 = vmatprep.subr.mxu0 0.0
      %469 = vmatpush1.msra.mxu0 0.0
      %470 = vmatprep.subr.mxu0 0.0
      %471 = vmatpush1.msra.mxu0 0.0
      %472 = vmatprep.subr.mxu0 0.0
      %473 = vmatpush1.msra.mxu0 0.0
      %474 = vmatprep.subr.mxu0 0.0
      %475 = vmatpush1.msra.mxu0 0.0
      %476 = vmatprep.subr.mxu0 0.0
      %477 = vmatpush1.msra.mxu0 0.0
      %478 = vmatprep.subr.mxu0 0.0
      %479 = vmatpush1.msra.mxu0 0.0
      %480 = vmatprep.subr.mxu0 0.0
      %481 = vmatpush1.msra.mxu0 0.0
      %482 = vmatprep.subr.mxu0 0.0
      %483 = vmatpush1.msra.mxu0 0.0
      %484 = vmatprep.subr.mxu0 0.0
      %485 = vmatpush1.msra.mxu0 0.0
      %486 = vmatprep.subr.mxu0 0.0
      %487 = vmatpush1.msra.mxu0 0.0
      %488 = vmatprep.subr.mxu0 0.0
      %489 = vmatpush1.msra.mxu0 0.0
      %490 = vmatprep.subr.mxu0 0.0
      %491 = vmatpush1.msra.mxu0 0.0
      %492 = vmatprep.subr.mxu0 0.0
      %493 = vmatpush1.msra.mxu0 0.0
      %494 = vmatprep.subr.mxu0 0.0
      %495 = vmatpush1.msra.mxu0 0.0
      %496 = vmatprep.mubr.f32.mxu0 0.0
      %497 = vmatmul.mubr.f32.gmra.mrb[0].mxu0 %v354
      %v498 = vpop.f32.mrb[0].mxu0
      %v499 = vadd.f32 0.0, %v498
      %v500 = vpop.f32.mrb[0].mxu0
      %501 = vdwg.mxu0
      %v502 = vmul.f32 %v343, %v270
      %vm503 = vcmask 27648
      %v504 = vsel %vm503, %v502, 0.0
      %505 = vadd.xlane.f32.xlu0 %v504
      %v506 = vpop.xlane.xlu0 %505
      %v507 = vmul.f32 %v275, 256.0
      %v508 = vadd.f32 %v426, %v507
      %v509 = vmul.f32 %v269, %v343
      %v510 = vsel %vm503, %v509, 0.0
      %511 = vadd.xlane.f32.xlu0 %v510
      %v512 = vpop.xlane.xlu0 %511
      %v513 = vmul.f32 %v275, %v351
      %v514 = vadd.f32 %v512, %v513
      %v515 = vmul.f32 %v499, %v269
      %v516 = vsel %vm503, %v515, 0.0
      %517 = vadd.xlane.f32.xlu0 %v516
      %v518 = vpop.xlane.xlu0 %517
      %v519 = vmul.f32 %v275, 2.0
      %v520 = vmul.f32 %v519, %v426
      %v521 = vadd.f32 %v518, %v520
      %v522 = vmul.f32 %v275, %v275
      %v523 = vmul.f32 %v522, 256.0
      %v524 = vadd.f32 %v521, %v523
      %526 = vset.pattern.permute.xlu0 0
      %527 = vperm.xlu0 %526, %v275
      %v528 = vpop.permute.xlu0 %527
      %v531 = vsel %vm352, %v271, 0
      %v534 = vsel %vm346, %v273, 0
      %v537 = vsel %vm346, %v274, 0
      %539 = vmatprep.subr.mxu0 %v537
      %540 = vmatpush1.msra.mxu0 %v534
      %541 = vmatprep.subr.mxu0 0.0
      %542 = vmatpush1.msra.mxu0 0.0
      %543 = vmatprep.subr.mxu0 0.0
      %544 = vmatpush1.msra.mxu0 0.0
      %545 = vmatprep.subr.mxu0 0.0
      %546 = vmatpush1.msra.mxu0 0.0
      %547 = vmatprep.subr.mxu0 0.0
      %548 = vmatpush1.msra.mxu0 0.0
      %549 = vmatprep.subr.mxu0 0.0
      %550 = vmatpush1.msra.mxu0 0.0
      %551 = vmatprep.subr.mxu0 0.0
      %552 = vmatpush1.msra.mxu0 0.0
      %553 = vmatprep.subr.mxu0 0.0
      %554 = vmatpush1.msra.mxu0 0.0
      %555 = vmatprep.subr.mxu0 0.0
      %556 = vmatpush1.msra.mxu0 0.0
      %557 = vmatprep.subr.mxu0 0.0
      %558 = vmatpush1.msra.mxu0 0.0
      %559 = vmatprep.subr.mxu0 0.0
      %560 = vmatpush1.msra.mxu0 0.0
      %561 = vmatprep.subr.mxu0 0.0
      %562 = vmatpush1.msra.mxu0 0.0
      %563 = vmatprep.subr.mxu0 0.0
      %564 = vmatpush1.msra.mxu0 0.0
      %565 = vmatprep.subr.mxu0 0.0
      %566 = vmatpush1.msra.mxu0 0.0
      %567 = vmatprep.subr.mxu0 0.0
      %568 = vmatpush1.msra.mxu0 0.0
      %569 = vmatprep.subr.mxu0 0.0
      %570 = vmatpush1.msra.mxu0 0.0
      %571 = vmatprep.subr.mxu0 0.0
      %572 = vmatpush1.msra.mxu0 0.0
      %573 = vmatprep.subr.mxu0 0.0
      %574 = vmatpush1.msra.mxu0 0.0
      %575 = vmatprep.subr.mxu0 0.0
      %576 = vmatpush1.msra.mxu0 0.0
      %577 = vmatprep.subr.mxu0 0.0
      %578 = vmatpush1.msra.mxu0 0.0
      %579 = vmatprep.subr.mxu0 0.0
      %580 = vmatpush1.msra.mxu0 0.0
      %581 = vmatprep.subr.mxu0 0.0
      %582 = vmatpush1.msra.mxu0 0.0
      %583 = vmatprep.subr.mxu0 0.0
      %584 = vmatpush1.msra.mxu0 0.0
      %585 = vmatprep.subr.mxu0 0.0
      %586 = vmatpush1.msra.mxu0 0.0
      %587 = vmatprep.subr.mxu0 0.0
      %588 = vmatpush1.msra.mxu0 0.0
      %589 = vmatprep.subr.mxu0 0.0
      %590 = vmatpush1.msra.mxu0 0.0
      %591 = vmatprep.subr.mxu0 0.0
      %592 = vmatpush1.msra.mxu0 0.0
      %593 = vmatprep.subr.mxu0 0.0
      %594 = vmatpush1.msra.mxu0 0.0
      %595 = vmatprep.subr.mxu0 0.0
      %596 = vmatpush1.msra.mxu0 0.0
      %597 = vmatprep.subr.mxu0 0.0
      %598 = vmatpush1.msra.mxu0 0.0
      %599 = vmatprep.subr.mxu0 0.0
      %600 = vmatpush1.msra.mxu0 0.0
      %601 = vmatprep.subr.mxu0 0.0
      %602 = vmatpush1.msra.mxu0 0.0
      %603 = vmatprep.mubr.f32.mxu0 0.0
      %604 = vmatmul.mubr.f32.gmra.mrb[0].mxu0 %v531
      %v605 = vpop.f32.mrb[0].mxu0
      %v606 = vadd.f32 %v528, %v605
      %v607 = vpop.f32.mrb[0].mxu0
      %v608 = vadd.f32 %v528, %v607
      %609 = vdwg.mxu0
      %v610 = vand.u32 2147483647, %v606
      %v611 = vand.u32 2147483647, %v608
      %v612 = vsel %vm346, %v610, 0.0
      %v613 = vsel %vm346, %v611, 0.0
      %v614 = vadd.f32 %v612, %v613
      %615 = vadd.xlane.f32.xlu0 %v614
      %v616 = vpop.xlane.xlu0 %615
      %v617 = vrot.slane %v616, 4
      %v618 = vadd.f32 %v616, %v617
      %v619 = vrot.slane %v618, 2
      %v620 = vadd.f32 %v618, %v619
      %v621 = vrot.slane %v620, 1
      %v622 = vadd.f32 %v620, %v621
      %s623 = vtos %v622
      %v624 = vadd.f32 %v524, %v506
      %v625 = vmul.f32 %v514, 2.0
      %v626 = vsub.f32 %v624, %v625
      %vm627 = vcmask 3072
      %v628 = vsel %vm627, %v626, 0.0
      %629 = vadd.xlane.f32.xlu0 %v628
      %v630 = vpop.xlane.xlu0 %629
      %v631 = vrot.slane %v630, 4
      %v632 = vadd.f32 %v630, %v631
      %v633 = vrot.slane %v632, 2
      %v634 = vadd.f32 %v632, %v633
      %v635 = vrot.slane %v634, 1
      %v636 = vadd.f32 %v634, %v635
      %s637 = vtos %v636
      %v638 = vmul.f32 %v508, 0.00390625
      %v639 = vmul.f32 %v351, 0.00390625
      %v640 = vmul.f32 %v524, 0.00390625
      %v641 = vmul.f32 %v638, %v638
      %v642 = vsub.f32 %v640, %v641
      %v643 = vmul.f32 %v506, 0.00390625
      %v644 = vmul.f32 %v639, %v639
      %v645 = vsub.f32 %v643, %v644
      %v646 = vmul.f32 %v514, 0.00390625
      %v647 = vmul.f32 %v638, %v639
      %v648 = vsub.f32 %v646, %v647
      %v649 = vmul.f32 %v638, 2.0
      %v650 = vmul.f32 %v649, %v639
      %v651 = vadd.f32 %v650, 0.0001
      %v652 = vmul.f32 %v648, 2.0
      %v653 = vadd.f32 %v652, 0.0009
      %v654 = vmul.f32 %v651, %v653
      %v655 = vadd.f32 %v641, %v644
      %v656 = vadd.f32 %v655, 0.0001
      %v657 = vadd.f32 %v642, %v645
      %v658 = vadd.f32 %v657, 0.0009
      %v659 = vmul.f32 %v656, %v658
      %v660 = vrcp.pop %v659
      %v661 = vmul.f32 %v654, %v660
      %v662 = vsel %vm627, %v661, 0.0
      %663 = vadd.xlane.f32.xlu0 %v662
      %v664 = vpop.xlane.xlu0 %663
      %v665 = vrot.slane %v664, 4
      %v666 = vadd.f32 %v664, %v665
      %v667 = vrot.slane %v666, 2
      %v668 = vadd.f32 %v666, %v667
      %v669 = vrot.slane %v668, 1
      %v670 = vadd.f32 %v668, %v669
      %s671 = vtos %v670
      %p672 = scmp.lt.s32.totalorder %s268, 14
      %s673 = scalar_select %p672, %s637, 0.0
      %s674 = scalar_select %p672, %s623, 0.0
      %s675 = scalar_select %p672, %s671, 0.0
      %s676 = sadd.f32 %s673, 0.0
      %s677 = sadd.f32 %s674, 0.0
      %s678 = sadd.f32 %s675, 0.0
      %v679 = vld [vmem:[%s243] sm:$0xcc]
      %v680 = vunpack.c.l.bf16 %v679
      %v681 = vunpack.c.h.bf16 %v679
      %v682 = vld [vmem:[%s258 + $0x4] sm:$0xf]
      %v685 = vrot.slane %v680, 4
      %v686 = vrot.slane %v681, 4
      %689 = vmatprep.subr.mxu0 %v686
      %690 = vmatpush1.xpose.msra.mxu0 %v685
      %691 = vmatprep.subr.mxu0 0.0
      %692 = vmatpush1.xpose.msra.mxu0 0.0
      %693 = vmatprep.subr.mxu0 0.0
      %694 = vmatpush1.xpose.msra.mxu0 0.0
      %695 = vmatprep.subr.mxu0 0.0
      %696 = vmatpush1.xpose.msra.mxu0 0.0
      %697 = vmatprep.subr.mxu0 0.0
      %698 = vmatpush1.xpose.msra.mxu0 0.0
      %699 = vmatprep.subr.mxu0 0.0
      %700 = vmatpush1.xpose.msra.mxu0 0.0
      %701 = vmatprep.subr.mxu0 0.0
      %702 = vmatpush1.xpose.msra.mxu0 0.0
      %703 = vmatprep.subr.mxu0 0.0
      %704 = vmatpush1.xpose.msra.mxu0 0.0
      %705 = vmatprep.subr.mxu0 0.0
      %706 = vmatpush1.xpose.msra.mxu0 0.0
      %707 = vmatprep.subr.mxu0 0.0
      %708 = vmatpush1.xpose.msra.mxu0 0.0
      %709 = vmatprep.subr.mxu0 0.0
      %710 = vmatpush1.xpose.msra.mxu0 0.0
      %711 = vmatprep.subr.mxu0 0.0
      %712 = vmatpush1.xpose.msra.mxu0 0.0
      %713 = vmatprep.subr.mxu0 0.0
      %714 = vmatpush1.xpose.msra.mxu0 0.0
      %715 = vmatprep.subr.mxu0 0.0
      %716 = vmatpush1.xpose.msra.mxu0 0.0
      %717 = vmatprep.subr.mxu0 0.0
      %718 = vmatpush1.xpose.msra.mxu0 0.0
      %719 = vmatprep.subr.mxu0 0.0
      %720 = vmatpush1.xpose.msra.mxu0 0.0
      %721 = vmatprep.subr.mxu0 0.0
      %722 = vmatpush1.xpose.msra.mxu0 0.0
      %723 = vmatprep.subr.mxu0 0.0
      %724 = vmatpush1.xpose.msra.mxu0 0.0
      %725 = vmatprep.subr.mxu0 0.0
      %726 = vmatpush1.xpose.msra.mxu0 0.0
      %727 = vmatprep.subr.mxu0 0.0
      %728 = vmatpush1.xpose.msra.mxu0 0.0
      %729 = vmatprep.subr.mxu0 0.0
      %730 = vmatpush1.xpose.msra.mxu0 0.0
      %731 = vmatprep.subr.mxu0 0.0
      %732 = vmatpush1.xpose.msra.mxu0 0.0
      %733 = vmatprep.subr.mxu0 0.0
      %734 = vmatpush1.xpose.msra.mxu0 0.0
      %735 = vmatprep.subr.mxu0 0.0
      %736 = vmatpush1.xpose.msra.mxu0 0.0
      %737 = vmatprep.subr.mxu0 0.0
      %738 = vmatpush1.xpose.msra.mxu0 0.0
      %739 = vmatprep.subr.mxu0 0.0
      %740 = vmatpush1.xpose.msra.mxu0 0.0
      %741 = vmatprep.subr.mxu0 0.0
      %742 = vmatpush1.xpose.msra.mxu0 0.0
      %743 = vmatprep.subr.mxu0 0.0
      %744 = vmatpush1.xpose.msra.mxu0 0.0
      %745 = vmatprep.subr.mxu0 0.0
      %746 = vmatpush1.xpose.msra.mxu0 0.0
      %747 = vmatprep.subr.mxu0 0.0
      %748 = vmatpush1.xpose.msra.mxu0 0.0
      %749 = vmatprep.subr.mxu0 0.0
      %750 = vmatpush1.xpose.msra.mxu0 0.0
      %751 = vmatprep.subr.mxu0 0.0
      %752 = vmatpush1.xpose.msra.mxu0 0.0
      %753 = vmatprep.mubr.f32.mxu0 %v686
      %754 = vmatmul.mubr.f32.gmra.mrb[0].mxu0 %v685
      %v755 = vpop.f32.mrb[0].mxu0
      %v756 = vadd.f32 0.0, %v755
      %v757 = vpop.f32.mrb[0].mxu0
      %758 = vdwg.mxu0
      %vm759 = vcmask 1047556
      %v760 = vsel %vm759, %v680, 0.0
      %v761 = vsel %vm759, %v681, 0.0
      %v762 = vadd.f32 %v760, %v761
      %763 = vadd.xlane.f32.xlu0 %v762
      %v764 = vpop.xlane.xlu0 %763
      %v766 = vrot.slane %v764, 4
      %v767 = vsel %vm346, %v766, 0
      %769 = vmatprep.subr.mxu0 0.0
      %770 = vmatpush1.msra.mxu0 %v767
      %771 = vmatprep.subr.mxu0 0.0
      %772 = vmatpush1.msra.mxu0 0.0
      %773 = vmatprep.subr.mxu0 0.0
      %774 = vmatpush1.msra.mxu0 0.0
      %775 = vmatprep.subr.mxu0 0.0
      %776 = vmatpush1.msra.mxu0 0.0
      %777 = vmatprep.subr.mxu0 0.0
      %778 = vmatpush1.msra.mxu0 0.0
      %779 = vmatprep.subr.mxu0 0.0
      %780 = vmatpush1.msra.mxu0 0.0
      %781 = vmatprep.subr.mxu0 0.0
      %782 = vmatpush1.msra.mxu0 0.0
      %783 = vmatprep.subr.mxu0 0.0
      %784 = vmatpush1.msra.mxu0 0.0
      %785 = vmatprep.subr.mxu0 0.0
      %786 = vmatpush1.msra.mxu0 0.0
      %787 = vmatprep.subr.mxu0 0.0
      %788 = vmatpush1.msra.mxu0 0.0
      %789 = vmatprep.subr.mxu0 0.0
      %790 = vmatpush1.msra.mxu0 0.0
      %791 = vmatprep.subr.mxu0 0.0
      %792 = vmatpush1.msra.mxu0 0.0
      %793 = vmatprep.subr.mxu0 0.0
      %794 = vmatpush1.msra.mxu0 0.0
      %795 = vmatprep.subr.mxu0 0.0
      %796 = vmatpush1.msra.mxu0 0.0
      %797 = vmatprep.subr.mxu0 0.0
      %798 = vmatpush1.msra.mxu0 0.0
      %799 = vmatprep.subr.mxu0 0.0
      %800 = vmatpush1.msra.mxu0 0.0
      %801 = vmatprep.subr.mxu0 0.0
      %802 = vmatpush1.msra.mxu0 0.0
      %803 = vmatprep.subr.mxu0 0.0
      %804 = vmatpush1.msra.mxu0 0.0
      %805 = vmatprep.subr.mxu0 0.0
      %806 = vmatpush1.msra.mxu0 0.0
      %807 = vmatprep.subr.mxu0 0.0
      %808 = vmatpush1.msra.mxu0 0.0
      %809 = vmatprep.subr.mxu0 0.0
      %810 = vmatpush1.msra.mxu0 0.0
      %811 = vmatprep.subr.mxu0 0.0
      %812 = vmatpush1.msra.mxu0 0.0
      %813 = vmatprep.subr.mxu0 0.0
      %814 = vmatpush1.msra.mxu0 0.0
      %815 = vmatprep.subr.mxu0 0.0
      %816 = vmatpush1.msra.mxu0 0.0
      %817 = vmatprep.subr.mxu0 0.0
      %818 = vmatpush1.msra.mxu0 0.0
      %819 = vmatprep.subr.mxu0 0.0
      %820 = vmatpush1.msra.mxu0 0.0
      %821 = vmatprep.subr.mxu0 0.0
      %822 = vmatpush1.msra.mxu0 0.0
      %823 = vmatprep.subr.mxu0 0.0
      %824 = vmatpush1.msra.mxu0 0.0
      %825 = vmatprep.subr.mxu0 0.0
      %826 = vmatpush1.msra.mxu0 0.0
      %827 = vmatprep.subr.mxu0 0.0
      %828 = vmatpush1.msra.mxu0 0.0
      %829 = vmatprep.subr.mxu0 0.0
      %830 = vmatpush1.msra.mxu0 0.0
      %831 = vmatprep.subr.mxu0 0.0
      %832 = vmatpush1.msra.mxu0 0.0
      %833 = vmatprep.mubr.f32.mxu0 0.0
      %834 = vmatmul.mubr.f32.gmra.mrb[0].mxu0 %v354
      %v835 = vpop.f32.mrb[0].mxu0
      %v836 = vadd.f32 0.0, %v835
      %v837 = vpop.f32.mrb[0].mxu0
      %838 = vdwg.mxu0
      %v840 = vsel %vm346, %v756, 0
      %842 = vmatprep.subr.mxu0 0.0
      %843 = vmatpush1.msra.mxu0 %v840
      %844 = vmatprep.subr.mxu0 0.0
      %845 = vmatpush1.msra.mxu0 0.0
      %846 = vmatprep.subr.mxu0 0.0
      %847 = vmatpush1.msra.mxu0 0.0
      %848 = vmatprep.subr.mxu0 0.0
      %849 = vmatpush1.msra.mxu0 0.0
      %850 = vmatprep.subr.mxu0 0.0
      %851 = vmatpush1.msra.mxu0 0.0
      %852 = vmatprep.subr.mxu0 0.0
      %853 = vmatpush1.msra.mxu0 0.0
      %854 = vmatprep.subr.mxu0 0.0
      %855 = vmatpush1.msra.mxu0 0.0
      %856 = vmatprep.subr.mxu0 0.0
      %857 = vmatpush1.msra.mxu0 0.0
      %858 = vmatprep.subr.mxu0 0.0
      %859 = vmatpush1.msra.mxu0 0.0
      %860 = vmatprep.subr.mxu0 0.0
      %861 = vmatpush1.msra.mxu0 0.0
      %862 = vmatprep.subr.mxu0 0.0
      %863 = vmatpush1.msra.mxu0 0.0
      %864 = vmatprep.subr.mxu0 0.0
      %865 = vmatpush1.msra.mxu0 0.0
      %866 = vmatprep.subr.mxu0 0.0
      %867 = vmatpush1.msra.mxu0 0.0
      %868 = vmatprep.subr.mxu0 0.0
      %869 = vmatpush1.msra.mxu0 0.0
      %870 = vmatprep.subr.mxu0 0.0
      %871 = vmatpush1.msra.mxu0 0.0
      %872 = vmatprep.subr.mxu0 0.0
      %873 = vmatpush1.msra.mxu0 0.0
      %874 = vmatprep.subr.mxu0 0.0
      %875 = vmatpush1.msra.mxu0 0.0
      %876 = vmatprep.subr.mxu0 0.0
      %877 = vmatpush1.msra.mxu0 0.0
      %878 = vmatprep.subr.mxu0 0.0
      %879 = vmatpush1.msra.mxu0 0.0
      %880 = vmatprep.subr.mxu0 0.0
      %881 = vmatpush1.msra.mxu0 0.0
      %882 = vmatprep.subr.mxu0 0.0
      %883 = vmatpush1.msra.mxu0 0.0
      %884 = vmatprep.subr.mxu0 0.0
      %885 = vmatpush1.msra.mxu0 0.0
      %886 = vmatprep.subr.mxu0 0.0
      %887 = vmatpush1.msra.mxu0 0.0
      %888 = vmatprep.subr.mxu0 0.0
      %889 = vmatpush1.msra.mxu0 0.0
      %890 = vmatprep.subr.mxu0 0.0
      %891 = vmatpush1.msra.mxu0 0.0
      %892 = vmatprep.subr.mxu0 0.0
      %893 = vmatpush1.msra.mxu0 0.0
      %894 = vmatprep.subr.mxu0 0.0
      %895 = vmatpush1.msra.mxu0 0.0
      %896 = vmatprep.subr.mxu0 0.0
      %897 = vmatpush1.msra.mxu0 0.0
      %898 = vmatprep.subr.mxu0 0.0
      %899 = vmatpush1.msra.mxu0 0.0
      %900 = vmatprep.subr.mxu0 0.0
      %901 = vmatpush1.msra.mxu0 0.0
      %902 = vmatprep.subr.mxu0 0.0
      %903 = vmatpush1.msra.mxu0 0.0
      %904 = vmatprep.subr.mxu0 0.0
      %905 = vmatpush1.msra.mxu0 0.0
      %906 = vmatprep.mubr.f32.mxu0 0.0
      %907 = vmatmul.mubr.f32.gmra.mrb[0].mxu0 %v354
      %v908 = vpop.f32.mrb[0].mxu0
      %v909 = vadd.f32 0.0, %v908
      %v910 = vpop.f32.mrb[0].mxu0
      %911 = vdwg.mxu0
      %v912 = vmul.f32 %v756, %v270
      %v913 = vsel %vm503, %v912, 0.0
      %914 = vadd.xlane.f32.xlu0 %v913
      %v915 = vpop.xlane.xlu0 %914
      %v916 = vmul.f32 %v682, 256.0
      %v917 = vadd.f32 %v836, %v916
      %v918 = vmul.f32 %v269, %v756
      %v919 = vsel %vm503, %v918, 0.0
      %920 = vadd.xlane.f32.xlu0 %v919
      %v921 = vpop.xlane.xlu0 %920
      %v923 = vmul.f32 %v682, %v766
      %v924 = vadd.f32 %v921, %v923
      %v925 = vmul.f32 %v909, %v269
      %v926 = vsel %vm503, %v925, 0.0
      %927 = vadd.xlane.f32.xlu0 %v926
      %v928 = vpop.xlane.xlu0 %927
      %v929 = vmul.f32 %v682, 2.0
      %v930 = vmul.f32 %v929, %v836
      %v931 = vadd.f32 %v928, %v930
      %v932 = vmul.f32 %v682, %v682
      %v933 = vmul.f32 %v932, 256.0
      %v934 = vadd.f32 %v931, %v933
      %936 = vset.pattern.permute.xlu0 0
      %937 = vperm.xlu0 %936, %v682
      %v938 = vpop.permute.xlu0 %937
      %v940 = vsel %vm346, %v685, 0
      %v942 = vsel %vm346, %v686, 0
      %944 = vmatprep.subr.mxu0 %v942
      %945 = vmatpush1.msra.mxu0 %v940
      %946 = vmatprep.subr.mxu0 0.0
      %947 = vmatpush1.msra.mxu0 0.0
      %948 = vmatprep.subr.mxu0 0.0
      %949 = vmatpush1.msra.mxu0 0.0
      %950 = vmatprep.subr.mxu0 0.0
      %951 = vmatpush1.msra.mxu0 0.0
      %952 = vmatprep.subr.mxu0 0.0
      %953 = vmatpush1.msra.mxu0 0.0
      %954 = vmatprep.subr.mxu0 0.0
      %955 = vmatpush1.msra.mxu0 0.0
      %956 = vmatprep.subr.mxu0 0.0
      %957 = vmatpush1.msra.mxu0 0.0
      %958 = vmatprep.subr.mxu0 0.0
      %959 = vmatpush1.msra.mxu0 0.0
      %960 = vmatprep.subr.mxu0 0.0
      %961 = vmatpush1.msra.mxu0 0.0
      %962 = vmatprep.subr.mxu0 0.0
      %963 = vmatpush1.msra.mxu0 0.0
      %964 = vmatprep.subr.mxu0 0.0
      %965 = vmatpush1.msra.mxu0 0.0
      %966 = vmatprep.subr.mxu0 0.0
      %967 = vmatpush1.msra.mxu0 0.0
      %968 = vmatprep.subr.mxu0 0.0
      %969 = vmatpush1.msra.mxu0 0.0
      %970 = vmatprep.subr.mxu0 0.0
      %971 = vmatpush1.msra.mxu0 0.0
      %972 = vmatprep.subr.mxu0 0.0
      %973 = vmatpush1.msra.mxu0 0.0
      %974 = vmatprep.subr.mxu0 0.0
      %975 = vmatpush1.msra.mxu0 0.0
      %976 = vmatprep.subr.mxu0 0.0
      %977 = vmatpush1.msra.mxu0 0.0
      %978 = vmatprep.subr.mxu0 0.0
      %979 = vmatpush1.msra.mxu0 0.0
      %980 = vmatprep.subr.mxu0 0.0
      %981 = vmatpush1.msra.mxu0 0.0
      %982 = vmatprep.subr.mxu0 0.0
      %983 = vmatpush1.msra.mxu0 0.0
      %984 = vmatprep.subr.mxu0 0.0
      %985 = vmatpush1.msra.mxu0 0.0
      %986 = vmatprep.subr.mxu0 0.0
      %987 = vmatpush1.msra.mxu0 0.0
      %988 = vmatprep.subr.mxu0 0.0
      %989 = vmatpush1.msra.mxu0 0.0
      %990 = vmatprep.subr.mxu0 0.0
      %991 = vmatpush1.msra.mxu0 0.0
      %992 = vmatprep.subr.mxu0 0.0
      %993 = vmatpush1.msra.mxu0 0.0
      %994 = vmatprep.subr.mxu0 0.0
      %995 = vmatpush1.msra.mxu0 0.0
      %996 = vmatprep.subr.mxu0 0.0
      %997 = vmatpush1.msra.mxu0 0.0
      %998 = vmatprep.subr.mxu0 0.0
      %999 = vmatpush1.msra.mxu0 0.0
      %1000 = vmatprep.subr.mxu0 0.0
      %1001 = vmatpush1.msra.mxu0 0.0
      %1002 = vmatprep.subr.mxu0 0.0
      %1003 = vmatpush1.msra.mxu0 0.0
      %1004 = vmatprep.subr.mxu0 0.0
      %1005 = vmatpush1.msra.mxu0 0.0
      %1006 = vmatprep.subr.mxu0 0.0
      %1007 = vmatpush1.msra.mxu0 0.0
      %1008 = vmatprep.mubr.f32.mxu0 0.0
      %1009 = vmatmul.mubr.f32.gmra.mrb[0].mxu0 %v531
      %v1010 = vpop.f32.mrb[0].mxu0
      %v1011 = vadd.f32 %v938, %v1010
      %v1012 = vpop.f32.mrb[0].mxu0
      %v1013 = vadd.f32 %v938, %v1012
      %1014 = vdwg.mxu0
      %v1015 = vand.u32 2147483647, %v1011
      %v1016 = vand.u32 2147483647, %v1013
      %v1017 = vsel %vm346, %v1015, 0.0
      %v1018 = vsel %vm346, %v1016, 0.0
      %v1019 = vadd.f32 %v1017, %v1018
      %1020 = vadd.xlane.f32.xlu0 %v1019
      %v1021 = vpop.xlane.xlu0 %1020
      %v1022 = vrot.slane %v1021, 4
      %v1023 = vadd.f32 %v1021, %v1022
      %v1024 = vrot.slane %v1023, 2
      %v1025 = vadd.f32 %v1023, %v1024
      %v1026 = vrot.slane %v1025, 1
      %v1027 = vadd.f32 %v1025, %v1026
      %s1028 = vtos %v1027
      %v1029 = vadd.f32 %v934, %v915
      %v1030 = vmul.f32 %v924, 2.0
      %v1031 = vsub.f32 %v1029, %v1030
      %v1032 = vsel %vm627, %v1031, 0.0
      %1033 = vadd.xlane.f32.xlu0 %v1032
      %v1034 = vpop.xlane.xlu0 %1033
      %v1035 = vrot.slane %v1034, 4
      %v1036 = vadd.f32 %v1034, %v1035
      %v1037 = vrot.slane %v1036, 2
      %v1038 = vadd.f32 %v1036, %v1037
      %v1039 = vrot.slane %v1038, 1
      %v1040 = vadd.f32 %v1038, %v1039
      %s1041 = vtos %v1040
      %v1042 = vmul.f32 %v917, 0.00390625
      %v1043 = vmul.f32 %v764, 0.00390625
      %v1044 = vmul.f32 %v934, 0.00390625
      %v1045 = vmul.f32 %v1042, %v1042
      %v1046 = vsub.f32 %v1044, %v1045
      %v1047 = vmul.f32 %v915, 0.00390625
      %v1048 = vmul.f32 %v1043, %v1043
      %v1050 = vrot.slane %v1048, 4
      %v1052 = vsub.f32 %v1047, %v1050
      %v1053 = vmul.f32 %v924, 0.00390625
      %v1055 = vrot.slane %v1043, 4
      %v1057 = vmul.f32 %v1042, %v1055
      %v1058 = vsub.f32 %v1053, %v1057
      %v1059 = vmul.f32 %v1042, 2.0
      %v1060 = vmul.f32 %v1059, %v1055
      %v1061 = vadd.f32 %v1060, 0.0001
      %v1062 = vmul.f32 %v1058, 2.0
      %v1063 = vadd.f32 %v1062, 0.0009
      %v1064 = vmul.f32 %v1061, %v1063
      %v1065 = vadd.f32 %v1045, %v1050
      %v1066 = vadd.f32 %v1065, 0.0001
      %v1067 = vadd.f32 %v1046, %v1052
      %v1068 = vadd.f32 %v1067, 0.0009
      %v1069 = vmul.f32 %v1066, %v1068
      %v1070 = vrcp.pop %v1069
      %v1071 = vmul.f32 %v1064, %v1070
      %v1072 = vsel %vm627, %v1071, 0.0
      %1073 = vadd.xlane.f32.xlu0 %v1072
      %v1074 = vpop.xlane.xlu0 %1073
      %v1075 = vrot.slane %v1074, 4
      %v1076 = vadd.f32 %v1074, %v1075
      %v1077 = vrot.slane %v1076, 2
      %v1078 = vadd.f32 %v1076, %v1077
      %v1079 = vrot.slane %v1078, 1
      %v1080 = vadd.f32 %v1078, %v1079
      %s1081 = vtos %v1080
      %s1082 = sadd.s32 %s268, 1
      %p1083 = scmp.lt.s32.totalorder %s1082, 14
      %s1084 = scalar_select %p1083, %s1041, 0.0
      %s1085 = scalar_select %p1083, %s1028, 0.0
      %s1086 = scalar_select %p1083, %s1081, 0.0
      %s1087 = sadd.f32 %s676, %s1084
      %s1088 = sadd.f32 %s677, %s1085
      %s1089 = sadd.f32 %s678, %s1086
      %v1090 = vld [vmem:[%s243 + $0x8] sm:$0x33]
      %v1091 = vunpack.c.l.bf16 %v1090
      %v1092 = vunpack.c.h.bf16 %v1090
      %v1093 = vld [vmem:[%s258 + $0x8] sm:$0xf]
      %1094 = vmatprep.subr.mxu0 %v1092
      %1095 = vmatpush1.xpose.msra.mxu0 %v1091
      %1096 = vmatprep.subr.mxu0 0.0
      %1097 = vmatpush1.xpose.msra.mxu0 0.0
      %1098 = vmatprep.subr.mxu0 0.0
      %1099 = vmatpush1.xpose.msra.mxu0 0.0
      %1100 = vmatprep.subr.mxu0 0.0
      %1101 = vmatpush1.xpose.msra.mxu0 0.0
      %1102 = vmatprep.subr.mxu0 0.0
      %1103 = vmatpush1.xpose.msra.mxu0 0.0
      %1104 = vmatprep.subr.mxu0 0.0
      %1105 = vmatpush1.xpose.msra.mxu0 0.0
      %1106 = vmatprep.subr.mxu0 0.0
      %1107 = vmatpush1.xpose.msra.mxu0 0.0
      %1108 = vmatprep.subr.mxu0 0.0
      %1109 = vmatpush1.xpose.msra.mxu0 0.0
      %1110 = vmatprep.subr.mxu0 0.0
      %1111 = vmatpush1.xpose.msra.mxu0 0.0
      %1112 = vmatprep.subr.mxu0 0.0
      %1113 = vmatpush1.xpose.msra.mxu0 0.0
      %1114 = vmatprep.subr.mxu0 0.0
      %1115 = vmatpush1.xpose.msra.mxu0 0.0
      %1116 = vmatprep.subr.mxu0 0.0
      %1117 = vmatpush1.xpose.msra.mxu0 0.0
      %1118 = vmatprep.subr.mxu0 0.0
      %1119 = vmatpush1.xpose.msra.mxu0 0.0
      %1120 = vmatprep.subr.mxu0 0.0
      %1121 = vmatpush1.xpose.msra.mxu0 0.0
      %1122 = vmatprep.subr.mxu0 0.0
      %1123 = vmatpush1.xpose.msra.mxu0 0.0
      %1124 = vmatprep.subr.mxu0 0.0
      %1125 = vmatpush1.xpose.msra.mxu0 0.0
      %1126 = vmatprep.subr.mxu0 0.0
      %1127 = vmatpush1.xpose.msra.mxu0 0.0
      %1128 = vmatprep.subr.mxu0 0.0
      %1129 = vmatpush1.xpose.msra.mxu0 0.0
      %1130 = vmatprep.subr.mxu0 0.0
      %1131 = vmatpush1.xpose.msra.mxu0 0.0
      %1132 = vmatprep.subr.mxu0 0.0
      %1133 = vmatpush1.xpose.msra.mxu0 0.0
      %1134 = vmatprep.subr.mxu0 0.0
      %1135 = vmatpush1.xpose.msra.mxu0 0.0
      %1136 = vmatprep.subr.mxu0 0.0
      %1137 = vmatpush1.xpose.msra.mxu0 0.0
      %1138 = vmatprep.subr.mxu0 0.0
      %1139 = vmatpush1.xpose.msra.mxu0 0.0
      %1140 = vmatprep.subr.mxu0 0.0
      %1141 = vmatpush1.xpose.msra.mxu0 0.0
      %1142 = vmatprep.subr.mxu0 0.0
      %1143 = vmatpush1.xpose.msra.mxu0 0.0
      %1144 = vmatprep.subr.mxu0 0.0
      %1145 = vmatpush1.xpose.msra.mxu0 0.0
      %1146 = vmatprep.subr.mxu0 0.0
      %1147 = vmatpush1.xpose.msra.mxu0 0.0
      %1148 = vmatprep.subr.mxu0 0.0
      %1149 = vmatpush1.xpose.msra.mxu0 0.0
      %1150 = vmatprep.subr.mxu0 0.0
      %1151 = vmatpush1.xpose.msra.mxu0 0.0
      %1152 = vmatprep.subr.mxu0 0.0
      %1153 = vmatpush1.xpose.msra.mxu0 0.0
      %1154 = vmatprep.subr.mxu0 0.0
      %1155 = vmatpush1.xpose.msra.mxu0 0.0
      %1156 = vmatprep.subr.mxu0 0.0
      %1157 = vmatpush1.xpose.msra.mxu0 0.0
      %1158 = vmatprep.mubr.f32.mxu0 %v1092
      %1159 = vmatmul.mubr.f32.gmra.mrb[0].mxu0 %v1091
      %v1160 = vpop.f32.mrb[0].mxu0
      %v1161 = vadd.f32 0.0, %v1160
      %v1162 = vpop.f32.mrb[0].mxu0
      %1163 = vdwg.mxu0
      %v1164 = vsel %vm346, %v1091, 0.0
      %v1165 = vsel %vm346, %v1092, 0.0
      %v1166 = vadd.f32 %v1164, %v1165
      %1167 = vadd.xlane.f32.xlu0 %v1166
      %v1168 = vpop.xlane.xlu0 %1167
      %v1170 = vsel %vm346, %v1168, 0
      %1172 = vmatprep.subr.mxu0 0.0
      %1173 = vmatpush1.msra.mxu0 %v1170
      %1174 = vmatprep.subr.mxu0 0.0
      %1175 = vmatpush1.msra.mxu0 0.0
      %1176 = vmatprep.subr.mxu0 0.0
      %1177 = vmatpush1.msra.mxu0 0.0
      %1178 = vmatprep.subr.mxu0 0.0
      %1179 = vmatpush1.msra.mxu0 0.0
      %1180 = vmatprep.subr.mxu0 0.0
      %1181 = vmatpush1.msra.mxu0 0.0
      %1182 = vmatprep.subr.mxu0 0.0
      %1183 = vmatpush1.msra.mxu0 0.0
      %1184 = vmatprep.subr.mxu0 0.0
      %1185 = vmatpush1.msra.mxu0 0.0
      %1186 = vmatprep.subr.mxu0 0.0
      %1187 = vmatpush1.msra.mxu0 0.0
      %1188 = vmatprep.subr.mxu0 0.0
      %1189 = vmatpush1.msra.mxu0 0.0
      %1190 = vmatprep.subr.mxu0 0.0
      %1191 = vmatpush1.msra.mxu0 0.0
      %1192 = vmatprep.subr.mxu0 0.0
      %1193 = vmatpush1.msra.mxu0 0.0
      %1194 = vmatprep.subr.mxu0 0.0
      %1195 = vmatpush1.msra.mxu0 0.0
      %1196 = vmatprep.subr.mxu0 0.0
      %1197 = vmatpush1.msra.mxu0 0.0
      %1198 = vmatprep.subr.mxu0 0.0
      %1199 = vmatpush1.msra.mxu0 0.0
      %1200 = vmatprep.subr.mxu0 0.0
      %1201 = vmatpush1.msra.mxu0 0.0
      %1202 = vmatprep.subr.mxu0 0.0
      %1203 = vmatpush1.msra.mxu0 0.0
      %1204 = vmatprep.subr.mxu0 0.0
      %1205 = vmatpush1.msra.mxu0 0.0
      %1206 = vmatprep.subr.mxu0 0.0
      %1207 = vmatpush1.msra.mxu0 0.0
      %1208 = vmatprep.subr.mxu0 0.0
      %1209 = vmatpush1.msra.mxu0 0.0
      %1210 = vmatprep.subr.mxu0 0.0
      %1211 = vmatpush1.msra.mxu0 0.0
      %1212 = vmatprep.subr.mxu0 0.0
      %1213 = vmatpush1.msra.mxu0 0.0
      %1214 = vmatprep.subr.mxu0 0.0
      %1215 = vmatpush1.msra.mxu0 0.0
      %1216 = vmatprep.subr.mxu0 0.0
      %1217 = vmatpush1.msra.mxu0 0.0
      %1218 = vmatprep.subr.mxu0 0.0
      %1219 = vmatpush1.msra.mxu0 0.0
      %1220 = vmatprep.subr.mxu0 0.0
      %1221 = vmatpush1.msra.mxu0 0.0
      %1222 = vmatprep.subr.mxu0 0.0
      %1223 = vmatpush1.msra.mxu0 0.0
      %1224 = vmatprep.subr.mxu0 0.0
      %1225 = vmatpush1.msra.mxu0 0.0
      %1226 = vmatprep.subr.mxu0 0.0
      %1227 = vmatpush1.msra.mxu0 0.0
      %1228 = vmatprep.subr.mxu0 0.0
      %1229 = vmatpush1.msra.mxu0 0.0
      %1230 = vmatprep.subr.mxu0 0.0
      %1231 = vmatpush1.msra.mxu0 0.0
      %1232 = vmatprep.subr.mxu0 0.0
      %1233 = vmatpush1.msra.mxu0 0.0
      %1234 = vmatprep.subr.mxu0 0.0
      %1235 = vmatpush1.msra.mxu0 0.0
      %1236 = vmatprep.mubr.f32.mxu0 0.0
      %1237 = vmatmul.mubr.f32.gmra.mrb[0].mxu0 %v354
      %v1238 = vpop.f32.mrb[0].mxu0
      %v1239 = vadd.f32 0.0, %v1238
      %v1240 = vpop.f32.mrb[0].mxu0
      %1241 = vdwg.mxu0
      %v1243 = vsel %vm346, %v1161, 0
      %1245 = vmatprep.subr.mxu0 0.0
      %1246 = vmatpush1.msra.mxu0 %v1243
      %1247 = vmatprep.subr.mxu0 0.0
      %1248 = vmatpush1.msra.mxu0 0.0
      %1249 = vmatprep.subr.mxu0 0.0
      %1250 = vmatpush1.msra.mxu0 0.0
      %1251 = vmatprep.subr.mxu0 0.0
      %1252 = vmatpush1.msra.mxu0 0.0
      %1253 = vmatprep.subr.mxu0 0.0
      %1254 = vmatpush1.msra.mxu0 0.0
      %1255 = vmatprep.subr.mxu0 0.0
      %1256 = vmatpush1.msra.mxu0 0.0
      %1257 = vmatprep.subr.mxu0 0.0
      %1258 = vmatpush1.msra.mxu0 0.0
      %1259 = vmatprep.subr.mxu0 0.0
      %1260 = vmatpush1.msra.mxu0 0.0
      %1261 = vmatprep.subr.mxu0 0.0
      %1262 = vmatpush1.msra.mxu0 0.0
      %1263 = vmatprep.subr.mxu0 0.0
      %1264 = vmatpush1.msra.mxu0 0.0
      %1265 = vmatprep.subr.mxu0 0.0
      %1266 = vmatpush1.msra.mxu0 0.0
      %1267 = vmatprep.subr.mxu0 0.0
      %1268 = vmatpush1.msra.mxu0 0.0
      %1269 = vmatprep.subr.mxu0 0.0
      %1270 = vmatpush1.msra.mxu0 0.0
      %1271 = vmatprep.subr.mxu0 0.0
      %1272 = vmatpush1.msra.mxu0 0.0
      %1273 = vmatprep.subr.mxu0 0.0
      %1274 = vmatpush1.msra.mxu0 0.0
      %1275 = vmatprep.subr.mxu0 0.0
      %1276 = vmatpush1.msra.mxu0 0.0
      %1277 = vmatprep.subr.mxu0 0.0
      %1278 = vmatpush1.msra.mxu0 0.0
      %1279 = vmatprep.subr.mxu0 0.0
      %1280 = vmatpush1.msra.mxu0 0.0
      %1281 = vmatprep.subr.mxu0 0.0
      %1282 = vmatpush1.msra.mxu0 0.0
      %1283 = vmatprep.subr.mxu0 0.0
      %1284 = vmatpush1.msra.mxu0 0.0
      %1285 = vmatprep.subr.mxu0 0.0
      %1286 = vmatpush1.msra.mxu0 0.0
      %1287 = vmatprep.subr.mxu0 0.0
      %1288 = vmatpush1.msra.mxu0 0.0
      %1289 = vmatprep.subr.mxu0 0.0
      %1290 = vmatpush1.msra.mxu0 0.0
      %1291 = vmatprep.subr.mxu0 0.0
      %1292 = vmatpush1.msra.mxu0 0.0
      %1293 = vmatprep.subr.mxu0 0.0
      %1294 = vmatpush1.msra.mxu0 0.0
      %1295 = vmatprep.subr.mxu0 0.0
      %1296 = vmatpush1.msra.mxu0 0.0
      %1297 = vmatprep.subr.mxu0 0.0
      %1298 = vmatpush1.msra.mxu0 0.0
      %1299 = vmatprep.subr.mxu0 0.0
      %1300 = vmatpush1.msra.mxu0 0.0
      %1301 = vmatprep.subr.mxu0 0.0
      %1302 = vmatpush1.msra.mxu0 0.0
      %1303 = vmatprep.subr.mxu0 0.0
      %1304 = vmatpush1.msra.mxu0 0.0
      %1305 = vmatprep.subr.mxu0 0.0
      %1306 = vmatpush1.msra.mxu0 0.0
      %1307 = vmatprep.subr.mxu0 0.0
      %1308 = vmatpush1.msra.mxu0 0.0
      %1309 = vmatprep.mubr.f32.mxu0 0.0
      %1310 = vmatmul.mubr.f32.gmra.mrb[0].mxu0 %v354
      %v1311 = vpop.f32.mrb[0].mxu0
      %v1312 = vadd.f32 0.0, %v1311
      %v1313 = vpop.f32.mrb[0].mxu0
      %1314 = vdwg.mxu0
      %v1315 = vmul.f32 %v1161, %v270
      %v1316 = vsel %vm503, %v1315, 0.0
      %1317 = vadd.xlane.f32.xlu0 %v1316
      %v1318 = vpop.xlane.xlu0 %1317
      %v1319 = vmul.f32 %v1093, 256.0
      %v1320 = vadd.f32 %v1239, %v1319
      %v1321 = vmul.f32 %v269, %v1161
      %v1322 = vsel %vm503, %v1321, 0.0
      %1323 = vadd.xlane.f32.xlu0 %v1322
      %v1324 = vpop.xlane.xlu0 %1323
      %v1325 = vmul.f32 %v1093, %v1168
      %v1326 = vadd.f32 %v1324, %v1325
      %v1327 = vmul.f32 %v1312, %v269
      %v1328 = vsel %vm503, %v1327, 0.0
      %1329 = vadd.xlane.f32.xlu0 %v1328
      %v1330 = vpop.xlane.xlu0 %1329
      %v1331 = vmul.f32 %v1093, 2.0
      %v1332 = vmul.f32 %v1331, %v1239
      %v1333 = vadd.f32 %v1330, %v1332
      %v1334 = vmul.f32 %v1093, %v1093
      %v1335 = vmul.f32 %v1334, 256.0
      %v1336 = vadd.f32 %v1333, %v1335
      %1338 = vset.pattern.permute.xlu0 0
      %1339 = vperm.xlu0 %1338, %v1093
      %v1340 = vpop.permute.xlu0 %1339
      %v1343 = vsel %vm346, %v1091, 0
      %v1346 = vsel %vm346, %v1092, 0
      %1348 = vmatprep.subr.mxu0 %v1346
      %1349 = vmatpush1.msra.mxu0 %v1343
      %1350 = vmatprep.subr.mxu0 0.0
      %1351 = vmatpush1.msra.mxu0 0.0
      %1352 = vmatprep.subr.mxu0 0.0
      %1353 = vmatpush1.msra.mxu0 0.0
      %1354 = vmatprep.subr.mxu0 0.0
      %1355 = vmatpush1.msra.mxu0 0.0
      %1356 = vmatprep.subr.mxu0 0.0
      %1357 = vmatpush1.msra.mxu0 0.0
      %1358 = vmatprep.subr.mxu0 0.0
      %1359 = vmatpush1.msra.mxu0 0.0
      %1360 = vmatprep.subr.mxu0 0.0
      %1361 = vmatpush1.msra.mxu0 0.0
      %1362 = vmatprep.subr.mxu0 0.0
      %1363 = vmatpush1.msra.mxu0 0.0
      %1364 = vmatprep.subr.mxu0 0.0
      %1365 = vmatpush1.msra.mxu0 0.0
      %1366 = vmatprep.subr.mxu0 0.0
      %1367 = vmatpush1.msra.mxu0 0.0
      %1368 = vmatprep.subr.mxu0 0.0
      %1369 = vmatpush1.msra.mxu0 0.0
      %1370 = vmatprep.subr.mxu0 0.0
      %1371 = vmatpush1.msra.mxu0 0.0
      %1372 = vmatprep.subr.mxu0 0.0
      %1373 = vmatpush1.msra.mxu0 0.0
      %1374 = vmatprep.subr.mxu0 0.0
      %1375 = vmatpush1.msra.mxu0 0.0
      %1376 = vmatprep.subr.mxu0 0.0
      %1377 = vmatpush1.msra.mxu0 0.0
      %1378 = vmatprep.subr.mxu0 0.0
      %1379 = vmatpush1.msra.mxu0 0.0
      %1380 = vmatprep.subr.mxu0 0.0
      %1381 = vmatpush1.msra.mxu0 0.0
      %1382 = vmatprep.subr.mxu0 0.0
      %1383 = vmatpush1.msra.mxu0 0.0
      %1384 = vmatprep.subr.mxu0 0.0
      %1385 = vmatpush1.msra.mxu0 0.0
      %1386 = vmatprep.subr.mxu0 0.0
      %1387 = vmatpush1.msra.mxu0 0.0
      %1388 = vmatprep.subr.mxu0 0.0
      %1389 = vmatpush1.msra.mxu0 0.0
      %1390 = vmatprep.subr.mxu0 0.0
      %1391 = vmatpush1.msra.mxu0 0.0
      %1392 = vmatprep.subr.mxu0 0.0
      %1393 = vmatpush1.msra.mxu0 0.0
      %1394 = vmatprep.subr.mxu0 0.0
      %1395 = vmatpush1.msra.mxu0 0.0
      %1396 = vmatprep.subr.mxu0 0.0
      %1397 = vmatpush1.msra.mxu0 0.0
      %1398 = vmatprep.subr.mxu0 0.0
      %1399 = vmatpush1.msra.mxu0 0.0
      %1400 = vmatprep.subr.mxu0 0.0
      %1401 = vmatpush1.msra.mxu0 0.0
      %1402 = vmatprep.subr.mxu0 0.0
      %1403 = vmatpush1.msra.mxu0 0.0
      %1404 = vmatprep.subr.mxu0 0.0
      %1405 = vmatpush1.msra.mxu0 0.0
      %1406 = vmatprep.subr.mxu0 0.0
      %1407 = vmatpush1.msra.mxu0 0.0
      %1408 = vmatprep.subr.mxu0 0.0
      %1409 = vmatpush1.msra.mxu0 0.0
      %1410 = vmatprep.subr.mxu0 0.0
      %1411 = vmatpush1.msra.mxu0 0.0
      %1412 = vmatprep.mubr.f32.mxu0 0.0
      %1413 = vmatmul.mubr.f32.gmra.mrb[0].mxu0 %v531
      %v1414 = vpop.f32.mrb[0].mxu0
      %v1415 = vadd.f32 %v1340, %v1414
      %v1416 = vpop.f32.mrb[0].mxu0
      %v1417 = vadd.f32 %v1340, %v1416
      %1418 = vdwg.mxu0
      %v1419 = vand.u32 2147483647, %v1415
      %v1420 = vand.u32 2147483647, %v1417
      %v1421 = vsel %vm346, %v1419, 0.0
      %v1422 = vsel %vm346, %v1420, 0.0
      %v1423 = vadd.f32 %v1421, %v1422
      %1424 = vadd.xlane.f32.xlu0 %v1423
      %v1425 = vpop.xlane.xlu0 %1424
      %v1426 = vrot.slane %v1425, 4
      %v1427 = vadd.f32 %v1425, %v1426
      %v1428 = vrot.slane %v1427, 2
      %v1429 = vadd.f32 %v1427, %v1428
      %v1430 = vrot.slane %v1429, 1
      %v1431 = vadd.f32 %v1429, %v1430
      %s1432 = vtos %v1431
      %v1433 = vadd.f32 %v1336, %v1318
      %v1434 = vmul.f32 %v1326, 2.0
      %v1435 = vsub.f32 %v1433, %v1434
      %v1436 = vsel %vm627, %v1435, 0.0
      %1437 = vadd.xlane.f32.xlu0 %v1436
      %v1438 = vpop.xlane.xlu0 %1437
      %v1439 = vrot.slane %v1438, 4
      %v1440 = vadd.f32 %v1438, %v1439
      %v1441 = vrot.slane %v1440, 2
      %v1442 = vadd.f32 %v1440, %v1441
      %v1443 = vrot.slane %v1442, 1
      %v1444 = vadd.f32 %v1442, %v1443
      %s1445 = vtos %v1444
      %v1446 = vmul.f32 %v1320, 0.00390625
      %v1447 = vmul.f32 %v1168, 0.00390625
      %v1448 = vmul.f32 %v1336, 0.00390625
      %v1449 = vmul.f32 %v1446, %v1446
      %v1450 = vsub.f32 %v1448, %v1449
      %v1451 = vmul.f32 %v1318, 0.00390625
      %v1452 = vmul.f32 %v1447, %v1447
      %v1453 = vsub.f32 %v1451, %v1452
      %v1454 = vmul.f32 %v1326, 0.00390625
      %v1455 = vmul.f32 %v1446, %v1447
      %v1456 = vsub.f32 %v1454, %v1455
      %v1457 = vmul.f32 %v1446, 2.0
      %v1458 = vmul.f32 %v1457, %v1447
      %v1459 = vadd.f32 %v1458, 0.0001
      %v1460 = vmul.f32 %v1456, 2.0
      %v1461 = vadd.f32 %v1460, 0.0009
      %v1462 = vmul.f32 %v1459, %v1461
      %v1463 = vadd.f32 %v1449, %v1452
      %v1464 = vadd.f32 %v1463, 0.0001
      %v1465 = vadd.f32 %v1450, %v1453
      %v1466 = vadd.f32 %v1465, 0.0009
      %v1467 = vmul.f32 %v1464, %v1466
      %v1468 = vrcp.pop %v1467
      %v1469 = vmul.f32 %v1462, %v1468
      %v1470 = vsel %vm627, %v1469, 0.0
      %1471 = vadd.xlane.f32.xlu0 %v1470
      %v1472 = vpop.xlane.xlu0 %1471
      %v1473 = vrot.slane %v1472, 4
      %v1474 = vadd.f32 %v1472, %v1473
      %v1475 = vrot.slane %v1474, 2
      %v1476 = vadd.f32 %v1474, %v1475
      %v1477 = vrot.slane %v1476, 1
      %v1478 = vadd.f32 %v1476, %v1477
      %s1479 = vtos %v1478
      %s1480 = sadd.s32 %s268, 2
      %p1481 = scmp.lt.s32.totalorder %s1480, 14
      %s1482 = scalar_select %p1481, %s1445, 0.0
      %s1483 = scalar_select %p1481, %s1432, 0.0
      %s1484 = scalar_select %p1481, %s1479, 0.0
      %s1485 = sadd.f32 %s1087, %s1482
      %s1486 = sadd.f32 %s1088, %s1483
      %s1487 = sadd.f32 %s1089, %s1484
      %v1488 = vld [vmem:[%s243 + $0x8] sm:$0xcc]
      %v1489 = vunpack.c.l.bf16 %v1488
      %v1490 = vunpack.c.h.bf16 %v1488
      %v1491 = vld [vmem:[%s258 + $0xc] sm:$0xf]
      %v1494 = vrot.slane %v1489, 4
      %v1495 = vrot.slane %v1490, 4
      %1498 = vmatprep.subr.mxu0 %v1495
      %1499 = vmatpush1.xpose.msra.mxu0 %v1494
      %1500 = vmatprep.subr.mxu0 0.0
      %1501 = vmatpush1.xpose.msra.mxu0 0.0
      %1502 = vmatprep.subr.mxu0 0.0
      %1503 = vmatpush1.xpose.msra.mxu0 0.0
      %1504 = vmatprep.subr.mxu0 0.0
      %1505 = vmatpush1.xpose.msra.mxu0 0.0
      %1506 = vmatprep.subr.mxu0 0.0
      %1507 = vmatpush1.xpose.msra.mxu0 0.0
      %1508 = vmatprep.subr.mxu0 0.0
      %1509 = vmatpush1.xpose.msra.mxu0 0.0
      %1510 = vmatprep.subr.mxu0 0.0
      %1511 = vmatpush1.xpose.msra.mxu0 0.0
      %1512 = vmatprep.subr.mxu0 0.0
      %1513 = vmatpush1.xpose.msra.mxu0 0.0
      %1514 = vmatprep.subr.mxu0 0.0
      %1515 = vmatpush1.xpose.msra.mxu0 0.0
      %1516 = vmatprep.subr.mxu0 0.0
      %1517 = vmatpush1.xpose.msra.mxu0 0.0
      %1518 = vmatprep.subr.mxu0 0.0
      %1519 = vmatpush1.xpose.msra.mxu0 0.0
      %1520 = vmatprep.subr.mxu0 0.0
      %1521 = vmatpush1.xpose.msra.mxu0 0.0
      %1522 = vmatprep.subr.mxu0 0.0
      %1523 = vmatpush1.xpose.msra.mxu0 0.0
      %1524 = vmatprep.subr.mxu0 0.0
      %1525 = vmatpush1.xpose.msra.mxu0 0.0
      %1526 = vmatprep.subr.mxu0 0.0
      %1527 = vmatpush1.xpose.msra.mxu0 0.0
      %1528 = vmatprep.subr.mxu0 0.0
      %1529 = vmatpush1.xpose.msra.mxu0 0.0
      %1530 = vmatprep.subr.mxu0 0.0
      %1531 = vmatpush1.xpose.msra.mxu0 0.0
      %1532 = vmatprep.subr.mxu0 0.0
      %1533 = vmatpush1.xpose.msra.mxu0 0.0
      %1534 = vmatprep.subr.mxu0 0.0
      %1535 = vmatpush1.xpose.msra.mxu0 0.0
      %1536 = vmatprep.subr.mxu0 0.0
      %1537 = vmatpush1.xpose.msra.mxu0 0.0
      %1538 = vmatprep.subr.mxu0 0.0
      %1539 = vmatpush1.xpose.msra.mxu0 0.0
      %1540 = vmatprep.subr.mxu0 0.0
      %1541 = vmatpush1.xpose.msra.mxu0 0.0
      %1542 = vmatprep.subr.mxu0 0.0
      %1543 = vmatpush1.xpose.msra.mxu0 0.0
      %1544 = vmatprep.subr.mxu0 0.0
      %1545 = vmatpush1.xpose.msra.mxu0 0.0
      %1546 = vmatprep.subr.mxu0 0.0
      %1547 = vmatpush1.xpose.msra.mxu0 0.0
      %1548 = vmatprep.subr.mxu0 0.0
      %1549 = vmatpush1.xpose.msra.mxu0 0.0
      %1550 = vmatprep.subr.mxu0 0.0
      %1551 = vmatpush1.xpose.msra.mxu0 0.0
      %1552 = vmatprep.subr.mxu0 0.0
      %1553 = vmatpush1.xpose.msra.mxu0 0.0
      %1554 = vmatprep.subr.mxu0 0.0
      %1555 = vmatpush1.xpose.msra.mxu0 0.0
      %1556 = vmatprep.subr.mxu0 0.0
      %1557 = vmatpush1.xpose.msra.mxu0 0.0
      %1558 = vmatprep.subr.mxu0 0.0
      %1559 = vmatpush1.xpose.msra.mxu0 0.0
      %1560 = vmatprep.subr.mxu0 0.0
      %1561 = vmatpush1.xpose.msra.mxu0 0.0
      %1562 = vmatprep.mubr.f32.mxu0 %v1495
      %1563 = vmatmul.mubr.f32.gmra.mrb[0].mxu0 %v1494
      %v1564 = vpop.f32.mrb[0].mxu0
      %v1565 = vadd.f32 0.0, %v1564
      %v1566 = vpop.f32.mrb[0].mxu0
      %1567 = vdwg.mxu0
      %v1568 = vsel %vm759, %v1489, 0.0
      %v1569 = vsel %vm759, %v1490, 0.0
      %v1570 = vadd.f32 %v1568, %v1569
      %1571 = vadd.xlane.f32.xlu0 %v1570
      %v1572 = vpop.xlane.xlu0 %1571
      %v1574 = vrot.slane %v1572, 4
      %v1575 = vsel %vm346, %v1574, 0
      %1577 = vmatprep.subr.mxu0 0.0
      %1578 = vmatpush1.msra.mxu0 %v1575
      %1579 = vmatprep.subr.mxu0 0.0
      %1580 = vmatpush1.msra.mxu0 0.0
      %1581 = vmatprep.subr.mxu0 0.0
      %1582 = vmatpush1.msra.mxu0 0.0
      %1583 = vmatprep.subr.mxu0 0.0
      %1584 = vmatpush1.msra.mxu0 0.0
      %1585 = vmatprep.subr.mxu0 0.0
      %1586 = vmatpush1.msra.mxu0 0.0
      %1587 = vmatprep.subr.mxu0 0.0
      %1588 = vmatpush1.msra.mxu0 0.0
      %1589 = vmatprep.subr.mxu0 0.0
      %1590 = vmatpush1.msra.mxu0 0.0
      %1591 = vmatprep.subr.mxu0 0.0
      %1592 = vmatpush1.msra.mxu0 0.0
      %1593 = vmatprep.subr.mxu0 0.0
      %1594 = vmatpush1.msra.mxu0 0.0
      %1595 = vmatprep.subr.mxu0 0.0
      %1596 = vmatpush1.msra.mxu0 0.0
      %1597 = vmatprep.subr.mxu0 0.0
      %1598 = vmatpush1.msra.mxu0 0.0
      %1599 = vmatprep.subr.mxu0 0.0
      %1600 = vmatpush1.msra.mxu0 0.0
      %1601 = vmatprep.subr.mxu0 0.0
      %1602 = vmatpush1.msra.mxu0 0.0
      %1603 = vmatprep.subr.mxu0 0.0
      %1604 = vmatpush1.msra.mxu0 0.0
      %1605 = vmatprep.subr.mxu0 0.0
      %1606 = vmatpush1.msra.mxu0 0.0
      %1607 = vmatprep.subr.mxu0 0.0
      %1608 = vmatpush1.msra.mxu0 0.0
      %1609 = vmatprep.subr.mxu0 0.0
      %1610 = vmatpush1.msra.mxu0 0.0
      %1611 = vmatprep.subr.mxu0 0.0
      %1612 = vmatpush1.msra.mxu0 0.0
      %1613 = vmatprep.subr.mxu0 0.0
      %1614 = vmatpush1.msra.mxu0 0.0
      %1615 = vmatprep.subr.mxu0 0.0
      %1616 = vmatpush1.msra.mxu0 0.0
      %1617 = vmatprep.subr.mxu0 0.0
      %1618 = vmatpush1.msra.mxu0 0.0
      %1619 = vmatprep.subr.mxu0 0.0
      %1620 = vmatpush1.msra.mxu0 0.0
      %1621 = vmatprep.subr.mxu0 0.0
      %1622 = vmatpush1.msra.mxu0 0.0
      %1623 = vmatprep.subr.mxu0 0.0
      %1624 = vmatpush1.msra.mxu0 0.0
      %1625 = vmatprep.subr.mxu0 0.0
      %1626 = vmatpush1.msra.mxu0 0.0
      %1627 = vmatprep.subr.mxu0 0.0
      %1628 = vmatpush1.msra.mxu0 0.0
      %1629 = vmatprep.subr.mxu0 0.0
      %1630 = vmatpush1.msra.mxu0 0.0
      %1631 = vmatprep.subr.mxu0 0.0
      %1632 = vmatpush1.msra.mxu0 0.0
      %1633 = vmatprep.subr.mxu0 0.0
      %1634 = vmatpush1.msra.mxu0 0.0
      %1635 = vmatprep.subr.mxu0 0.0
      %1636 = vmatpush1.msra.mxu0 0.0
      %1637 = vmatprep.subr.mxu0 0.0
      %1638 = vmatpush1.msra.mxu0 0.0
      %1639 = vmatprep.subr.mxu0 0.0
      %1640 = vmatpush1.msra.mxu0 0.0
      %1641 = vmatprep.mubr.f32.mxu0 0.0
      %1642 = vmatmul.mubr.f32.gmra.mrb[0].mxu0 %v354
      %v1643 = vpop.f32.mrb[0].mxu0
      %v1644 = vadd.f32 0.0, %v1643
      %v1645 = vpop.f32.mrb[0].mxu0
      %1646 = vdwg.mxu0
      %v1648 = vsel %vm346, %v1565, 0
      %1650 = vmatprep.subr.mxu0 0.0
      %1651 = vmatpush1.msra.mxu0 %v1648
      %1652 = vmatprep.subr.mxu0 0.0
      %1653 = vmatpush1.msra.mxu0 0.0
      %1654 = vmatprep.subr.mxu0 0.0
      %1655 = vmatpush1.msra.mxu0 0.0
      %1656 = vmatprep.subr.mxu0 0.0
      %1657 = vmatpush1.msra.mxu0 0.0
      %1658 = vmatprep.subr.mxu0 0.0
      %1659 = vmatpush1.msra.mxu0 0.0
      %1660 = vmatprep.subr.mxu0 0.0
      %1661 = vmatpush1.msra.mxu0 0.0
      %1662 = vmatprep.subr.mxu0 0.0
      %1663 = vmatpush1.msra.mxu0 0.0
      %1664 = vmatprep.subr.mxu0 0.0
      %1665 = vmatpush1.msra.mxu0 0.0
      %1666 = vmatprep.subr.mxu0 0.0
      %1667 = vmatpush1.msra.mxu0 0.0
      %1668 = vmatprep.subr.mxu0 0.0
      %1669 = vmatpush1.msra.mxu0 0.0
      %1670 = vmatprep.subr.mxu0 0.0
      %1671 = vmatpush1.msra.mxu0 0.0
      %1672 = vmatprep.subr.mxu0 0.0
      %1673 = vmatpush1.msra.mxu0 0.0
      %1674 = vmatprep.subr.mxu0 0.0
      %1675 = vmatpush1.msra.mxu0 0.0
      %1676 = vmatprep.subr.mxu0 0.0
      %1677 = vmatpush1.msra.mxu0 0.0
      %1678 = vmatprep.subr.mxu0 0.0
      %1679 = vmatpush1.msra.mxu0 0.0
      %1680 = vmatprep.subr.mxu0 0.0
      %1681 = vmatpush1.msra.mxu0 0.0
      %1682 = vmatprep.subr.mxu0 0.0
      %1683 = vmatpush1.msra.mxu0 0.0
      %1684 = vmatprep.subr.mxu0 0.0
      %1685 = vmatpush1.msra.mxu0 0.0
      %1686 = vmatprep.subr.mxu0 0.0
      %1687 = vmatpush1.msra.mxu0 0.0
      %1688 = vmatprep.subr.mxu0 0.0
      %1689 = vmatpush1.msra.mxu0 0.0
      %1690 = vmatprep.subr.mxu0 0.0
      %1691 = vmatpush1.msra.mxu0 0.0
      %1692 = vmatprep.subr.mxu0 0.0
      %1693 = vmatpush1.msra.mxu0 0.0
      %1694 = vmatprep.subr.mxu0 0.0
      %1695 = vmatpush1.msra.mxu0 0.0
      %1696 = vmatprep.subr.mxu0 0.0
      %1697 = vmatpush1.msra.mxu0 0.0
      %1698 = vmatprep.subr.mxu0 0.0
      %1699 = vmatpush1.msra.mxu0 0.0
      %1700 = vmatprep.subr.mxu0 0.0
      %1701 = vmatpush1.msra.mxu0 0.0
      %1702 = vmatprep.subr.mxu0 0.0
      %1703 = vmatpush1.msra.mxu0 0.0
      %1704 = vmatprep.subr.mxu0 0.0
      %1705 = vmatpush1.msra.mxu0 0.0
      %1706 = vmatprep.subr.mxu0 0.0
      %1707 = vmatpush1.msra.mxu0 0.0
      %1708 = vmatprep.subr.mxu0 0.0
      %1709 = vmatpush1.msra.mxu0 0.0
      %1710 = vmatprep.subr.mxu0 0.0
      %1711 = vmatpush1.msra.mxu0 0.0
      %1712 = vmatprep.subr.mxu0 0.0
      %1713 = vmatpush1.msra.mxu0 0.0
      %1714 = vmatprep.mubr.f32.mxu0 0.0
      %1715 = vmatmul.mubr.f32.gmra.mrb[0].mxu0 %v354
      %v1716 = vpop.f32.mrb[0].mxu0
      %v1717 = vadd.f32 0.0, %v1716
      %v1718 = vpop.f32.mrb[0].mxu0
      %1719 = vdwg.mxu0
      %v1720 = vmul.f32 %v1565, %v270
      %v1721 = vsel %vm503, %v1720, 0.0
      %1722 = vadd.xlane.f32.xlu0 %v1721
      %v1723 = vpop.xlane.xlu0 %1722
      %v1724 = vmul.f32 %v1491, 256.0
      %v1725 = vadd.f32 %v1644, %v1724
      %v1726 = vmul.f32 %v269, %v1565
      %v1727 = vsel %vm503, %v1726, 0.0
      %1728 = vadd.xlane.f32.xlu0 %v1727
      %v1729 = vpop.xlane.xlu0 %1728
      %v1731 = vmul.f32 %v1491, %v1574
      %v1732 = vadd.f32 %v1729, %v1731
      %v1733 = vmul.f32 %v1717, %v269
      %v1734 = vsel %vm503, %v1733, 0.0
      %1735 = vadd.xlane.f32.xlu0 %v1734
      %v1736 = vpop.xlane.xlu0 %1735
      %v1737 = vmul.f32 %v1491, 2.0
      %v1738 = vmul.f32 %v1737, %v1644
      %v1739 = vadd.f32 %v1736, %v1738
      %v1740 = vmul.f32 %v1491, %v1491
      %v1741 = vmul.f32 %v1740, 256.0
      %v1742 = vadd.f32 %v1739, %v1741
      %1744 = vset.pattern.permute.xlu0 0
      %1745 = vperm.xlu0 %1744, %v1491
      %v1746 = vpop.permute.xlu0 %1745
      %v1748 = vsel %vm346, %v1494, 0
      %v1750 = vsel %vm346, %v1495, 0
      %1752 = vmatprep.subr.mxu0 %v1750
      %1753 = vmatpush1.msra.mxu0 %v1748
      %1754 = vmatprep.subr.mxu0 0.0
      %1755 = vmatpush1.msra.mxu0 0.0
      %1756 = vmatprep.subr.mxu0 0.0
      %1757 = vmatpush1.msra.mxu0 0.0
      %1758 = vmatprep.subr.mxu0 0.0
      %1759 = vmatpush1.msra.mxu0 0.0
      %1760 = vmatprep.subr.mxu0 0.0
      %1761 = vmatpush1.msra.mxu0 0.0
      %1762 = vmatprep.subr.mxu0 0.0
      %1763 = vmatpush1.msra.mxu0 0.0
      %1764 = vmatprep.subr.mxu0 0.0
      %1765 = vmatpush1.msra.mxu0 0.0
      %1766 = vmatprep.subr.mxu0 0.0
      %1767 = vmatpush1.msra.mxu0 0.0
      %1768 = vmatprep.subr.mxu0 0.0
      %1769 = vmatpush1.msra.mxu0 0.0
      %1770 = vmatprep.subr.mxu0 0.0
      %1771 = vmatpush1.msra.mxu0 0.0
      %1772 = vmatprep.subr.mxu0 0.0
      %1773 = vmatpush1.msra.mxu0 0.0
      %1774 = vmatprep.subr.mxu0 0.0
      %1775 = vmatpush1.msra.mxu0 0.0
      %1776 = vmatprep.subr.mxu0 0.0
      %1777 = vmatpush1.msra.mxu0 0.0
      %1778 = vmatprep.subr.mxu0 0.0
      %1779 = vmatpush1.msra.mxu0 0.0
      %1780 = vmatprep.subr.mxu0 0.0
      %1781 = vmatpush1.msra.mxu0 0.0
      %1782 = vmatprep.subr.mxu0 0.0
      %1783 = vmatpush1.msra.mxu0 0.0
      %1784 = vmatprep.subr.mxu0 0.0
      %1785 = vmatpush1.msra.mxu0 0.0
      %1786 = vmatprep.subr.mxu0 0.0
      %1787 = vmatpush1.msra.mxu0 0.0
      %1788 = vmatprep.subr.mxu0 0.0
      %1789 = vmatpush1.msra.mxu0 0.0
      %1790 = vmatprep.subr.mxu0 0.0
      %1791 = vmatpush1.msra.mxu0 0.0
      %1792 = vmatprep.subr.mxu0 0.0
      %1793 = vmatpush1.msra.mxu0 0.0
      %1794 = vmatprep.subr.mxu0 0.0
      %1795 = vmatpush1.msra.mxu0 0.0
      %1796 = vmatprep.subr.mxu0 0.0
      %1797 = vmatpush1.msra.mxu0 0.0
      %1798 = vmatprep.subr.mxu0 0.0
      %1799 = vmatpush1.msra.mxu0 0.0
      %1800 = vmatprep.subr.mxu0 0.0
      %1801 = vmatpush1.msra.mxu0 0.0
      %1802 = vmatprep.subr.mxu0 0.0
      %1803 = vmatpush1.msra.mxu0 0.0
      %1804 = vmatprep.subr.mxu0 0.0
      %1805 = vmatpush1.msra.mxu0 0.0
      %1806 = vmatprep.subr.mxu0 0.0
      %1807 = vmatpush1.msra.mxu0 0.0
      %1808 = vmatprep.subr.mxu0 0.0
      %1809 = vmatpush1.msra.mxu0 0.0
      %1810 = vmatprep.subr.mxu0 0.0
      %1811 = vmatpush1.msra.mxu0 0.0
      %1812 = vmatprep.subr.mxu0 0.0
      %1813 = vmatpush1.msra.mxu0 0.0
      %1814 = vmatprep.subr.mxu0 0.0
      %1815 = vmatpush1.msra.mxu0 0.0
      %1816 = vmatprep.mubr.f32.mxu0 0.0
      %1817 = vmatmul.mubr.f32.gmra.mrb[0].mxu0 %v531
      %v1818 = vpop.f32.mrb[0].mxu0
      %v1819 = vadd.f32 %v1746, %v1818
      %v1820 = vpop.f32.mrb[0].mxu0
      %v1821 = vadd.f32 %v1746, %v1820
      %1822 = vdwg.mxu0
      %v1823 = vand.u32 2147483647, %v1819
      %v1824 = vand.u32 2147483647, %v1821
      %v1825 = vsel %vm346, %v1823, 0.0
      %v1826 = vsel %vm346, %v1824, 0.0
      %v1827 = vadd.f32 %v1825, %v1826
      %1828 = vadd.xlane.f32.xlu0 %v1827
      %v1829 = vpop.xlane.xlu0 %1828
      %v1830 = vrot.slane %v1829, 4
      %v1831 = vadd.f32 %v1829, %v1830
      %v1832 = vrot.slane %v1831, 2
      %v1833 = vadd.f32 %v1831, %v1832
      %v1834 = vrot.slane %v1833, 1
      %v1835 = vadd.f32 %v1833, %v1834
      %s1836 = vtos %v1835
      %v1837 = vadd.f32 %v1742, %v1723
      %v1838 = vmul.f32 %v1732, 2.0
      %v1839 = vsub.f32 %v1837, %v1838
      %v1840 = vsel %vm627, %v1839, 0.0
      %1841 = vadd.xlane.f32.xlu0 %v1840
      %v1842 = vpop.xlane.xlu0 %1841
      %v1843 = vrot.slane %v1842, 4
      %v1844 = vadd.f32 %v1842, %v1843
      %v1845 = vrot.slane %v1844, 2
      %v1846 = vadd.f32 %v1844, %v1845
      %v1847 = vrot.slane %v1846, 1
      %v1848 = vadd.f32 %v1846, %v1847
      %s1849 = vtos %v1848
      %v1850 = vmul.f32 %v1725, 0.00390625
      %v1851 = vmul.f32 %v1572, 0.00390625
      %v1852 = vmul.f32 %v1742, 0.00390625
      %v1853 = vmul.f32 %v1850, %v1850
      %v1854 = vsub.f32 %v1852, %v1853
      %v1855 = vmul.f32 %v1723, 0.00390625
      %v1856 = vmul.f32 %v1851, %v1851
      %v1858 = vrot.slane %v1856, 4
      %v1860 = vsub.f32 %v1855, %v1858
      %v1861 = vmul.f32 %v1732, 0.00390625
      %v1863 = vrot.slane %v1851, 4
      %v1865 = vmul.f32 %v1850, %v1863
      %v1866 = vsub.f32 %v1861, %v1865
      %v1867 = vmul.f32 %v1850, 2.0
      %v1868 = vmul.f32 %v1867, %v1863
      %v1869 = vadd.f32 %v1868, 0.0001
      %v1870 = vmul.f32 %v1866, 2.0
      %v1871 = vadd.f32 %v1870, 0.0009
      %v1872 = vmul.f32 %v1869, %v1871
      %v1873 = vadd.f32 %v1853, %v1858
      %v1874 = vadd.f32 %v1873, 0.0001
      %v1875 = vadd.f32 %v1854, %v1860
      %v1876 = vadd.f32 %v1875, 0.0009
      %v1877 = vmul.f32 %v1874, %v1876
      %v1878 = vrcp.pop %v1877
      %v1879 = vmul.f32 %v1872, %v1878
      %v1880 = vsel %vm627, %v1879, 0.0
      %1881 = vadd.xlane.f32.xlu0 %v1880
      %v1882 = vpop.xlane.xlu0 %1881
      %v1883 = vrot.slane %v1882, 4
      %v1884 = vadd.f32 %v1882, %v1883
      %v1885 = vrot.slane %v1884, 2
      %v1886 = vadd.f32 %v1884, %v1885
      %v1887 = vrot.slane %v1886, 1
      %v1888 = vadd.f32 %v1886, %v1887
      %s1889 = vtos %v1888
      %s1890 = sadd.s32 %s268, 3
      %p1891 = scmp.lt.s32.totalorder %s1890, 14
      %s1892 = scalar_select %p1891, %s1849, 0.0
      %s1893 = scalar_select %p1891, %s1836, 0.0
      %s1894 = scalar_select %p1891, %s1889, 0.0
      %s1895 = sadd.f32 %s1485, %s1892
      %s1896 = sadd.f32 %s1486, %s1893
      %s1897 = sadd.f32 %s1487, %s1894
      %v1898 = vlaneseq
      %v1899 = vand.u32 %v1898, 127
      %vm1900 = vcmp.eq.s32.totalorder %v1899, 0
      %v1901 = vstv %s1895
      %v1902 = vsel %vm1900, %v1901, 0.0
      %vm1903 = vcmp.eq.s32.totalorder %v1899, 1
      %v1904 = vstv %s1896
      %v1905 = vsel %vm1903, %v1904, 0.0
      %v1906 = vadd.f32 %v1902, %v1905
      %vm1907 = vcmp.eq.s32.totalorder %v1899, 2
      %v1908 = vstv %s1897
      %v1909 = vsel %vm1907, %v1908, 0.0
      %v1910 = vadd.f32 %v1906, %v1909
      %1911 = vst [vmem:[%s267] sm:$0xff] %v1910
      %p1912 = scmp.lt.s32.totalorder %s15, 3
      %s1913 = scalar_select %p1912, %s15, 3
      %s1914 = smul.addr %s1913, 8
      %s1915 = scalar_lea.vmem %s4, %s1914
      // Predicated region
      $region37: #{gaussian_diffusion_forward.1} parent=35 // pred_check
        %p1916 = pneg %p127
      $region38: #{gaussian_diffusion_forward.1} parent=35 // pred_check_branch
        %1918 = sbr.rel (%p1916) target = $region40
      $region39: #{gaussian_diffusion_forward.1} parent=35 // pred_region
        _
      $region40: #{gaussian_diffusion_forward.1} parent=35 // pred_fallthru
        _
    $region36: #{gaussian_diffusion_forward.1} parent=5 // pred_fallthru
      _
    %p1919 = scmp.le.s32.totalorder 2, %s10
    // Predicated region
    $region41: #{gaussian_diffusion_forward.1} parent=5 // pred_check
      %p1920 = pneg %p1919
    $region42: #{gaussian_diffusion_forward.1} parent=5 // pred_check_branch
      %1922 = sbr.rel (%p1920) target = $region44
    $region43: #{gaussian_diffusion_forward.1} parent=5 // pred_region
      %s1923 = ssub.s32 %s10, 2
      // Predicated region
      $region45: #{gaussian_diffusion_forward.1} parent=43 // pred_check
        %p1924 = pneg %p133
      $region46: #{gaussian_diffusion_forward.1} parent=43 // pred_check_branch
        %1926 = sbr.rel (%p1924) target = $region48
      $region47: #{gaussian_diffusion_forward.1} parent=43 // pred_region
        %p1927 = scmp.lt.s32.totalorder %s16, 3
        %s1928 = scalar_select %p1927, %s16, 3
        %s1929 = smul.addr %s1928, 8
        %s1930 = scalar_lea.vmem %s4, %s1929
      $region48: #{gaussian_diffusion_forward.1} parent=43 // pred_fallthru
        _
    $region44: #{gaussian_diffusion_forward.1} parent=5 // pred_fallthru
      _
  $region6: #{gaussian_diffusion_forward.1} parent=0 // loop_footer
    %s14 = sadd.s32 1, %s10
  $region7: #{gaussian_diffusion_forward.1} parent=0 // loop_footer_branch
    %9 = sbr.rel target = $region3
  $region8: #{gaussian_diffusion_forward.1} parent=0 // loop_exit
    _

</llo_original>
